<compile_context>
chip_gen: v5e
topology: v5e:2x2
jax: 0.10.0
libtpu: 0.0.40
codegen_flags: <defaults>
</compile_context>

<pallas_src>
import functools

import jax
import jax.numpy as jnp
from jax.experimental import pallas as pl
from jax.experimental.pallas import tpu as pltpu


def _round_up(a, m):
    return (a + m - 1) // m * m


# ---------------------------------------------------------------------------
# Pass 1: pointwise_conv1 + GLU + depthwise conv + partial BN statistics
# ---------------------------------------------------------------------------
def _pass1_kernel(xcur_ref, xnext_ref, w1_ref, b1_ref, wd_ref, bd_ref,
                  mid_ref, stats_ref, glu_scr, *,
                  kernel_size, t_orig, tile_t, halo_blk):
    K = kernel_size
    pad = (K - 1) // 2
    HB = halo_blk
    t = pl.program_id(1)
    Cp = xcur_ref.shape[-1]
    row0 = t * tile_t

    # ---- left halo: carry previous tile's last `pad` GLU rows -------------
    # Valid because the time axis is the inner, SEQUENTIAL grid axis
    # ("arbitrary"); marking it "parallel" would silently break this carry
    # and the stats accumulation below.
    if pad > 0:
        @pl.when(t == 0)
        def _():
            glu_scr[0:HB, :] = jnp.zeros((HB, Cp), jnp.float32)

        @pl.when(t > 0)
        def _():
            # previous iteration's rows [tile_t - pad, tile_t) of its tile
            glu_scr[HB - pad:HB, :] = glu_scr[HB + tile_t - pad:HB + tile_t, :]

    # ---- pointwise_conv1 + GLU, fused over current tile + right halo ------
    w1 = w1_ref[...]                      # (Cp, 2Cp) bf16, VMEM-resident
    b1 = b1_ref[...]                      # (1, 2Cp)  f32
    x_all = jnp.concatenate([xcur_ref[0], xnext_ref[0]], axis=0)  # bf16
    h = jnp.dot(x_all, w1, preferred_element_type=jnp.float32) + b1
    glu = h[:, :Cp] * jax.nn.sigmoid(h[:, Cp:])

    # Zero rows beyond the real sequence (== conv zero padding, and keeps
    # them out of the BN statistics).
    rows = row0 + jax.lax.broadcasted_iota(jnp.int32, (tile_t + HB, 1), 0)
    valid = rows < t_orig
    glu = jnp.where(valid, glu, 0.0)

    # Sublane-aligned bulk store (offset HB is a multiple of 8).
    glu_scr[HB:HB + tile_t + HB, :] = glu

    # ---- depthwise conv over time: K taps read the haloed scratch ---------
    wd = wd_ref[...]                       # (K, Cp) f32
    acc = jnp.zeros((tile_t, Cp), jnp.float32)
    for k in range(K):                     # static unroll, K small
        acc = acc + glu_scr[HB - pad + k:HB - pad + k + tile_t, :] * wd[k:k + 1, :]
    acc = acc + bd_ref[...]                # bias added once

    # Intermediate goes to HBM in bf16 (halves the mid round-trip traffic).
    mid_ref[0, :, :] = acc.astype(mid_ref.dtype)

    # ---- partial BatchNorm stats from the f32 accumulator ------------------
    accv = jnp.where(valid[:tile_t], acc, 0.0)
    s = jnp.sum(accv, axis=0, keepdims=True)            # (1, Cp)
    sq = jnp.sum(accv * accv, axis=0, keepdims=True)    # (1, Cp)

    @pl.when(t == 0)
    def _():
        stats_ref[...] = jnp.zeros_like(stats_ref)

    stats_ref[0, 0:1, :] = stats_ref[0, 0:1, :] + s     # row 0: sum
    stats_ref[0, 8:9, :] = stats_ref[0, 8:9, :] + sq    # row 8: sum of squares


# ---------------------------------------------------------------------------
# Pass 2: BatchNorm (affine folded into scale/shift) + ReLU + pointwise_conv2
# ---------------------------------------------------------------------------
def _pass2_kernel(mid_ref, scale_ref, shift_ref, w2_ref, b2_ref, o_ref):
    y = mid_ref[0, :, :].astype(jnp.float32) * scale_ref[...] + shift_ref[...]
    y = jnp.maximum(y, 0.0)                               # ReLU
    out = jnp.dot(y.astype(jnp.bfloat16), w2_ref[...],
                  preferred_element_type=jnp.float32) + b2_ref[...]
    o_ref[0, :, :] = out.astype(o_ref.dtype)


# ---------------------------------------------------------------------------
# Wrapper
# ---------------------------------------------------------------------------
@functools.partial(jax.jit, static_argnames=("kernel_size", "eps", "tile_t"))
def conformer_convolution(x, params, *, kernel_size, eps=1e-5, tile_t=512):
    """x: (B, T, C) float32 -> (B, T, C) float32 (train-mode BatchNorm)."""
    B, T, C = x.shape
    K = kernel_size
    pad = (K - 1) // 2

    # TPU-friendly padded sizes: lane-dense channels; time granule is a
    # multiple of 16 so bf16 blocks stay sublane-pack aligned.
    Cp = _round_up(max(C, 128), 128)
    HB = max(16, _round_up(max(pad, 1), 16))   # halo granule (>= pad)
    tile_t = max(tile_t, HB)
    tile_t = _round_up(min(tile_t, _round_up(T, HB)), HB)
    Tp = _round_up(T, tile_t)
    nT = Tp // tile_t
    r = tile_t // HB                           # HB-granules per time tile
    mmax = Tp // HB - 1

    # Pad input and parameters (padded weights/bias are zero so padded
    # channels stay exactly zero through the whole pipeline). Input is
    # stored/streamed in bf16 (matmul inputs were bf16 already).
    xp = jnp.pad(x, ((0, 0), (0, Tp - T), (0, Cp - C))).astype(jnp.bfloat16)

    w1, b1 = params["w1"], params["b1"]
    w1p = jnp.zeros((Cp, 2 * Cp), jnp.float32)
    w1p = w1p.at[:C, :C].set(w1[:, :C]).at[:C, Cp:Cp + C].set(w1[:, C:])
    b1p = jnp.zeros((1, 2 * Cp), jnp.float32)
    b1p = b1p.at[:, :C].set(b1[:, :C]).at[:, Cp:Cp + C].set(b1[:, C:])
    wdp = jnp.zeros((K, Cp), jnp.float32).at[:, :C].set(params["wd"])
    bdp = jnp.zeros((1, Cp), jnp.float32).at[:, :C].set(params["bd"])
    gammap = jnp.zeros((1, Cp), jnp.float32).at[:, :C].set(params["gamma"])
    betap = jnp.zeros((1, Cp), jnp.float32).at[:, :C].set(params["beta"])
    w2p = jnp.zeros((Cp, Cp), jnp.float32).at[:C, :C].set(params["w2"])
    b2p = jnp.zeros((1, Cp), jnp.float32).at[:, :C].set(params["b2"])

    w1b = w1p.astype(jnp.bfloat16)             # bf16 MXU inputs, f32 accumulate
    w2b = w2p.astype(jnp.bfloat16)

    tile3 = (1, tile_t, Cp)
    halo3 = (1, HB, Cp)

    kern1 = functools.partial(_pass1_kernel, kernel_size=K, t_orig=T,
                              tile_t=tile_t, halo_blk=HB)

    mid, stats = pl.pallas_call(
        kern1,
        grid=(B, nT),
        in_specs=[
            # current tile (bf16)
            pl.BlockSpec(tile3, lambda b, t: (b, t, 0)),
            # next-tile halo granule (clamped; masked in-kernel at the end)
            pl.BlockSpec(halo3,
                         lambda b, t, r=r, m=mmax:
                         (b, jnp.minimum((t + 1) * r, m), 0)),
            # VMEM-resident weights (constant index_map -> no re-DMA)
            pl.BlockSpec((Cp, 2 * Cp), lambda b, t: (0, 0)),
            pl.BlockSpec((1, 2 * Cp), lambda b, t: (0, 0)),
            pl.BlockSpec((K, Cp), lambda b, t: (0, 0)),
            pl.BlockSpec((1, Cp), lambda b, t: (0, 0)),
        ],
        out_specs=[
            pl.BlockSpec(tile3, lambda b, t: (b, t, 0)),
            # single resident stats block per batch row (row 0 sum, row 8 sq)
            pl.BlockSpec((1, 16, Cp), lambda b, t: (b, 0, 0)),
        ],
        out_shape=[
            jax.ShapeDtypeStruct((B, Tp, Cp), jnp.bfloat16),
            jax.ShapeDtypeStruct((B, 16, Cp), jnp.float32),
        ],
        scratch_shapes=[
            pltpu.VMEM((HB + tile_t + HB, Cp), jnp.float32)],
        compiler_params=pltpu.CompilerParams(
            # t MUST stay "arbitrary": stats accumulation + GLU halo carry
            # rely on sequential execution along the time axis.
            dimension_semantics=("parallel", "arbitrary"),
            vmem_limit_bytes=64 * 1024 * 1024),
    )(xp, xp, w1b, b1p, wdp, bdp)

    # Finalize BN statistics (tiny (B, C) -> (C,) reduction, biased variance).
    # TODO(synk): one-pass E[x^2]-mu^2 can lose precision for huge B*T with
    # |mean| >> std; switch to a two-pass mean if tolerances tighten.
    n = jnp.float32(B * T)
    total = jnp.sum(stats[:, 0, :], axis=0)
    total_sq = jnp.sum(stats[:, 8, :], axis=0)
    mean = total / n
    var = jnp.maximum(total_sq / n - mean * mean, 0.0)
    scale = gammap[0] * jax.lax.rsqrt(var + eps)
    shift = betap[0] - mean * scale
    scale = scale.reshape(1, Cp)
    shift = shift.reshape(1, Cp)

    out = pl.pallas_call(
        _pass2_kernel,
        grid=(B, nT),
        in_specs=[
            pl.BlockSpec(tile3, lambda b, t: (b, t, 0)),
            pl.BlockSpec((1, Cp), lambda b, t: (0, 0)),
            pl.BlockSpec((1, Cp), lambda b, t: (0, 0)),
            pl.BlockSpec((Cp, Cp), lambda b, t: (0, 0)),
            pl.BlockSpec((1, Cp), lambda b, t: (0, 0)),
        ],
        out_specs=pl.BlockSpec(tile3, lambda b, t: (b, t, 0)),
        out_shape=jax.ShapeDtypeStruct((B, Tp, Cp), jnp.float32),
        compiler_params=pltpu.CompilerParams(
            dimension_semantics=("parallel", "parallel"),
            vmem_limit_bytes=64 * 1024 * 1024),
    )(mid, scale, shift, w2b, b2p)

    return out[:, :T, :C]


# ---------------------------------------------------------------------------
# Parameters / reference
# ---------------------------------------------------------------------------
def init_params(key, channels, kernel_size):
    """Deterministic synthetic parameters (shapes match the PyTorch module)."""
    C, K = channels, kernel_size
    keys = jax.random.split(key, 6)
    w1 = jax.random.normal(keys[0], (C, 2 * C), jnp.float32) * 0.1
    b1 = jax.random.normal(keys[1], (1, 2 * C), jnp.float32) * 0.1
    wd = jax.random.normal(keys[2], (K, C), jnp.float32) * 0.1
    bd = jax.random.normal(keys[3], (1, C), jnp.float32) * 0.1
    gamma = jnp.ones((1, C), jnp.float32)
    beta = jnp.zeros((1, C), jnp.float32)
    w2 = jax.random.normal(keys[4], (C, C), jnp.float32) * 0.1
    b2 = jax.random.normal(keys[5], (1, C), jnp.float32) * 0.1
    return dict(w1=w1, b1=b1, wd=wd, bd=bd, gamma=gamma, beta=beta,
                w2=w2, b2=b2)


def _bf16_round(a):
    # Mirror the kernel's precision policy: matmul inputs and the HBM
    # intermediate are rounded to bf16, accumulation stays in f32.
    return a.astype(jnp.bfloat16).astype(jnp.float32)


def reference(x, p, *, kernel_size, eps=1e-5):
    """Pure-JAX reference mirroring the PyTorch forward (train-mode BN)."""
    B, T, C = x.shape
    K = kernel_size
    pad = (K - 1) // 2
    hi = jax.lax.Precision.HIGHEST
    h = jnp.einsum("btc,cd->btd", _bf16_round(x), _bf16_round(p["w1"]),
                   precision=hi) + p["b1"][0]
    glu = h[..., :C] * jax.nn.sigmoid(h[..., C:])
    hp = jnp.pad(glu, ((0, 0), (pad, pad), (0, 0)))
    acc = sum(hp[:, k:k + T, :] * p["wd"][k][None, None, :] for k in range(K))
    acc = acc + p["bd"][0]
    mean = acc.mean(axis=(0, 1), keepdims=True)
    var = ((acc - mean) ** 2).mean(axis=(0, 1), keepdims=True)
    # kernel stores the intermediate in bf16 but BN stats come from f32 acc
    y = (_bf16_round(acc) - mean) / jnp.sqrt(var + eps) * p["gamma"][0] + p["beta"][0]
    y = jnp.maximum(y, 0.0)
    return jnp.einsum("btc,cd->btd", _bf16_round(y), _bf16_round(p["w2"]),
                      precision=hi) + p["b2"][0]


if __name__ == "__main__":
    # TODO(synk): BatchNorm1d running-stat buffer updates (a training-time side
    # effect) are not modeled; they do not affect this forward output.
    B, T, C, K = 2, 28, 16, 3   # small shapes; kernel_size odd as required
    key = jax.random.PRNGKey(0)
    kx, kp = jax.random.split(key)
    x = jax.random.normal(kx, (B, T, C), jnp.float32)
    params = init_params(kp, C, K)

    ref = reference(x, params, kernel_size=K)

    # Multi-tile path: exercises the GLU halo carry, next-tile halo masking
    # and the padded-tail masking (Tp > T).
    out_small = conformer_convolution(x, params, kernel_size=K, tile_t=16)
    out_small = jax.block_until_ready(out_small)
    assert out_small.shape == (B, T, C)
    assert jnp.allclose(out_small, ref, atol=1e-2, rtol=1e-2), \
        "mismatch vs reference (multi-tile)"

    # Default tile-size path.
    out = conformer_convolution(x, params, kernel_size=K)
    out = jax.block_until_ready(out)
    assert out.shape == (B, T, C)
    assert jnp.allclose(out, ref, atol=1e-2, rtol=1e-2), \
        "mismatch vs reference (default tile)"

    print("KERNEL_OK")
</pallas_src>

<mosaic_0001>
module attributes {stable_mosaic.version = 11 : i64} {
  func.func @_pass1_kernel(%arg0: i32, %arg1: i32, %arg2: memref<1x16x128xbf16, #tpu.memory_space<vmem>>, %arg3: memref<1x16x128xbf16, #tpu.memory_space<vmem>>, %arg4: memref<128x256xbf16, #tpu.memory_space<vmem>>, %arg5: memref<1x256xf32, #tpu.memory_space<vmem>>, %arg6: memref<3x128xf32, #tpu.memory_space<vmem>>, %arg7: memref<1x128xf32, #tpu.memory_space<vmem>>, %arg8: memref<1x16x128xbf16, #tpu.memory_space<vmem>>, %arg9: memref<1x16x128xf32, #tpu.memory_space<vmem>>, %arg10: memref<48x128xf32, #tpu.memory_space<vmem>>) attributes {dimension_semantics = [#tpu.dimension_semantics<parallel>, #tpu.dimension_semantics<arbitrary>], iteration_bounds = array<i64: 2, 2>, scalar_prefetch = 0 : i64, scratch_operands = 1 : i64, tpu.core_type = #tpu.core_type<tc>, window_params = [{transform_indices = @transform_0, window_bounds = array<i64: 1, 16, 128>}, {transform_indices = @transform_1, window_bounds = array<i64: 1, 16, 128>}, {pipeline_mode = #tpu.pipeline_mode<synchronous>, transform_indices = @transform_2, window_bounds = array<i64: 128, 256>}, {pipeline_mode = #tpu.pipeline_mode<synchronous>, transform_indices = @transform_3, window_bounds = array<i64: 1, 256>}, {pipeline_mode = #tpu.pipeline_mode<synchronous>, transform_indices = @transform_4, window_bounds = array<i64: 3, 128>}, {pipeline_mode = #tpu.pipeline_mode<synchronous>, transform_indices = @transform_5, window_bounds = array<i64: 1, 128>}, {transform_indices = @transform_6, window_bounds = array<i64: 1, 16, 128>}, {transform_indices = @transform_7, window_bounds = array<i64: 1, 16, 128>}]} {
    %c16_i32 = arith.constant 16 : i32
    %0 = arith.muli %arg1, %c16_i32 : i32
    %c0_i32 = arith.constant 0 : i32
    %1 = arith.cmpi eq, %arg1, %c0_i32 : i32
    %2 = arith.extui %1 : i1 to i32
    %c0_i32_0 = arith.constant 0 : i32
    %3 = arith.cmpi ne, %2, %c0_i32_0 : i32
    scf.if %3 {
      %cst_43 = arith.constant 0.000000e+00 : f32
      %84 = vector.broadcast %cst_43 : f32 to vector<16x128xf32>
      %c0_44 = arith.constant 0 : index
      %c0_45 = arith.constant 0 : index
      %85 = vector.load %arg10[%c0_44, %c0_45] : memref<48x128xf32, #tpu.memory_space<vmem>>, vector<16x128xf32>
      tpu.vector_store %arg10[%c0_44, %c0_45], %84 {strides = array<i32>} : memref<48x128xf32, #tpu.memory_space<vmem>>, vector<16x128xf32>,
    } else {
    }
    %c0_i32_1 = arith.constant 0 : i32
    %4 = arith.cmpi sgt, %arg1, %c0_i32_1 : i32
    %5 = arith.extui %4 : i1 to i32
    %c0_i32_2 = arith.constant 0 : i32
    %6 = arith.cmpi ne, %5, %c0_i32_2 : i32
    scf.if %6 {
      %c31 = arith.constant 31 : index
      %c0_43 = arith.constant 0 : index
      %84 = vector.load %arg10[%c31, %c0_43] : memref<48x128xf32, #tpu.memory_space<vmem>>, vector<1x128xf32>
      %c15_44 = arith.constant 15 : index
      %c0_45 = arith.constant 0 : index
      %85 = vector.load %arg10[%c15_44, %c0_45] : memref<48x128xf32, #tpu.memory_space<vmem>>, vector<1x128xf32>
      tpu.vector_store %arg10[%c15_44, %c0_45], %84 {strides = array<i32>} : memref<48x128xf32, #tpu.memory_space<vmem>>, vector<1x128xf32>,
    } else {
    }
    %c0 = arith.constant 0 : index
    %c0_3 = arith.constant 0 : index
    %7 = vector.load %arg4[%c0, %c0_3] : memref<128x256xbf16, #tpu.memory_space<vmem>>, vector<128x256xbf16>
    %c0_4 = arith.constant 0 : index
    %c0_5 = arith.constant 0 : index
    %8 = vector.load %arg5[%c0_4, %c0_5] : memref<1x256xf32, #tpu.memory_space<vmem>>, vector<1x256xf32>
    %c0_6 = arith.constant 0 : index
    %c0_7 = arith.constant 0 : index
    %c0_8 = arith.constant 0 : index
    %9 = vector.load %arg2[%c0_6, %c0_7, %c0_8] : memref<1x16x128xbf16, #tpu.memory_space<vmem>>, vector<1x16x128xbf16>
    %10 = vector.shape_cast %9 : vector<1x16x128xbf16> to vector<16x128xbf16>
    %c0_9 = arith.constant 0 : index
    %c0_10 = arith.constant 0 : index
    %c0_11 = arith.constant 0 : index
    %11 = vector.load %arg3[%c0_9, %c0_10, %c0_11] : memref<1x16x128xbf16, #tpu.memory_space<vmem>>, vector<1x16x128xbf16>
    %12 = vector.shape_cast %11 : vector<1x16x128xbf16> to vector<16x128xbf16>
    %13 = tpu.concatenate %10, %12 in 0 : vector<16x128xbf16>, vector<16x128xbf16> -> vector<32x128xbf16>
    %cst = arith.constant dense<0.000000e+00> : vector<32x256xf32>
    %14 = tpu.matmul %13, %7, %cst {dimension_numbers = #tpu.dot_dimension_numbers<[1], [0], [0], [1], [0, 0, 1, 1], [], []>} : vector<32x128xbf16>, vector<128x256xbf16>, vector<32x256xf32> -> vector<32x256xf32>
    %15 = vector.broadcast %8 : vector<1x256xf32> to vector<32x256xf32>
    %16 = arith.addf %14, %15 : vector<32x256xf32>
    %17 = vector.extract_strided_slice %16 {offsets = [0, 0], sizes = [32, 128], strides = [1, 1]} : vector<32x256xf32> to vector<32x128xf32>
    %18 = vector.extract_strided_slice %16 {offsets = [0, 128], sizes = [32, 128], strides = [1, 1]} : vector<32x256xf32> to vector<32x128xf32>
    %19 = arith.negf %18 : vector<32x128xf32>
    %20 = math.exp %19 : vector<32x128xf32>
    %cst_12 = arith.constant 1.000000e+00 : f32
    %21 = vector.broadcast %cst_12 : f32 to vector<32x128xf32>
    %22 = arith.addf %21, %20 : vector<32x128xf32>
    %23 = arith.divf %21, %22 : vector<32x128xf32>
    %24 = arith.mulf %17, %23 : vector<32x128xf32>
    %25 = tpu.iota {dimensions = array<i32: 0>} : vector<32x1xi32>
    %26 = vector.broadcast %0 : i32 to vector<32x1xi32>
    %27 = arith.addi %26, %25 : vector<32x1xi32>
    %c28_i32 = arith.constant 28 : i32
    %28 = vector.broadcast %c28_i32 : i32 to vector<32x1xi32>
    %29 = arith.cmpi slt, %27, %28 : vector<32x1xi32>
    %cst_13 = arith.constant 0.000000e+00 : f32
    %30 = vector.shape_cast %29 : vector<32x1xi1> to vector<32x1xi1>
    %31 = vector.broadcast %30 : vector<32x1xi1> to vector<32x128xi1>
    %32 = vector.broadcast %cst_13 : f32 to vector<32x128xf32>
    %33 = arith.select %31, %24, %32 : vector<32x128xi1>, vector<32x128xf32>
    %c16 = arith.constant 16 : index
    %c0_14 = arith.constant 0 : index
    %34 = vector.load %arg10[%c16, %c0_14] : memref<48x128xf32, #tpu.memory_space<vmem>>, vector<32x128xf32>
    tpu.vector_store %arg10[%c16, %c0_14], %33 {strides = array<i32>} : memref<48x128xf32, #tpu.memory_space<vmem>>, vector<32x128xf32>,
    %c0_15 = arith.constant 0 : index
    %c0_16 = arith.constant 0 : index
    %35 = vector.load %arg6[%c0_15, %c0_16] : memref<3x128xf32, #tpu.memory_space<vmem>>, vector<3x128xf32>
    %cst_17 = arith.constant 0.000000e+00 : f32
    %36 = vector.broadcast %cst_17 : f32 to vector<16x128xf32>
    %c15 = arith.constant 15 : index
    %c0_18 = arith.constant 0 : index
    %37 = vector.load %arg10[%c15, %c0_18] : memref<48x128xf32, #tpu.memory_space<vmem>>, vector<16x128xf32>
    %38 = vector.extract_strided_slice %35 {offsets = [0, 0], sizes = [1, 128], strides = [1, 1]} : vector<3x128xf32> to vector<1x128xf32>
    %39 = vector.broadcast %38 : vector<1x128xf32> to vector<16x128xf32>
    %40 = arith.mulf %37, %39 : vector<16x128xf32>
    %41 = arith.addf %36, %40 : vector<16x128xf32>
    %c16_19 = arith.constant 16 : index
    %c0_20 = arith.constant 0 : index
    %42 = vector.load %arg10[%c16_19, %c0_20] : memref<48x128xf32, #tpu.memory_space<vmem>>, vector<16x128xf32>
    %43 = vector.extract_strided_slice %35 {offsets = [1, 0], sizes = [1, 128], strides = [1, 1]} : vector<3x128xf32> to vector<1x128xf32>
    %44 = vector.broadcast %43 : vector<1x128xf32> to vector<16x128xf32>
    %45 = arith.mulf %42, %44 : vector<16x128xf32>
    %46 = arith.addf %41, %45 : vector<16x128xf32>
    %c17 = arith.constant 17 : index
    %c0_21 = arith.constant 0 : index
    %47 = vector.load %arg10[%c17, %c0_21] : memref<48x128xf32, #tpu.memory_space<vmem>>, vector<16x128xf32>
    %48 = vector.extract_strided_slice %35 {offsets = [2, 0], sizes = [1, 128], strides = [1, 1]} : vector<3x128xf32> to vector<1x128xf32>
    %49 = vector.broadcast %48 : vector<1x128xf32> to vector<16x128xf32>
    %50 = arith.mulf %47, %49 : vector<16x128xf32>
    %51 = arith.addf %46, %50 : vector<16x128xf32>
    %c0_22 = arith.constant 0 : index
    %c0_23 = arith.constant 0 : index
    %52 = vector.load %arg7[%c0_22, %c0_23] : memref<1x128xf32, #tpu.memory_space<vmem>>, vector<1x128xf32>
    %53 = vector.broadcast %52 : vector<1x128xf32> to vector<16x128xf32>
    %54 = arith.addf %51, %53 : vector<16x128xf32>
    %55 = arith.truncf %54 : vector<16x128xf32> to vector<16x128xbf16>
    %c0_24 = arith.constant 0 : index
    %c0_25 = arith.constant 0 : index
    %c0_26 = arith.constant 0 : index
    %56 = vector.load %arg8[%c0_24, %c0_25, %c0_26] : memref<1x16x128xbf16, #tpu.memory_space<vmem>>, vector<1x16x128xbf16>
    %57 = vector.shape_cast %56 : vector<1x16x128xbf16> to vector<16x128xbf16>
    %58 = vector.shape_cast %55 : vector<16x128xbf16> to vector<1x16x128xbf16>
    tpu.vector_store %arg8[%c0_24, %c0_25, %c0_26], %58 {strides = array<i32>} : memref<1x16x128xbf16, #tpu.memory_space<vmem>>, vector<1x16x128xbf16>,
    %59 = vector.extract_strided_slice %29 {offsets = [0, 0], sizes = [16, 1], strides = [1, 1]} : vector<32x1xi1> to vector<16x1xi1>
    %cst_27 = arith.constant 0.000000e+00 : f32
    %60 = vector.shape_cast %59 : vector<16x1xi1> to vector<16x1xi1>
    %61 = vector.broadcast %60 : vector<16x1xi1> to vector<16x128xi1>
    %62 = vector.broadcast %cst_27 : f32 to vector<16x128xf32>
    %63 = arith.select %61, %54, %62 : vector<16x128xi1>, vector<16x128xf32>
    %cst_28 = arith.constant dense<0.000000e+00> : vector<128xf32>
    %64 = vector.multi_reduction <add>, %63, %cst_28 [0] : vector<16x128xf32> to vector<128xf32>
    %65 = vector.shape_cast %64 : vector<128xf32> to vector<1x128xf32>
    %66 = arith.mulf %63, %63 : vector<16x128xf32>
    %cst_29 = arith.constant dense<0.000000e+00> : vector<128xf32>
    %67 = vector.multi_reduction <add>, %66, %cst_29 [0] : vector<16x128xf32> to vector<128xf32>
    %68 = vector.shape_cast %67 : vector<128xf32> to vector<1x128xf32>
    %c0_i32_30 = arith.constant 0 : i32
    %69 = arith.cmpi eq, %arg1, %c0_i32_30 : i32
    %70 = arith.extui %69 : i1 to i32
    %c0_i32_31 = arith.constant 0 : i32
    %71 = arith.cmpi ne, %70, %c0_i32_31 : i32
    scf.if %71 {
      %cst_43 = arith.constant 0.000000e+00 : f32
      %84 = vector.broadcast %cst_43 : f32 to vector<1x16x128xf32>
      %c0_44 = arith.constant 0 : index
      %c0_45 = arith.constant 0 : index
      %c0_46 = arith.constant 0 : index
      %85 = vector.load %arg9[%c0_44, %c0_45, %c0_46] : memref<1x16x128xf32, #tpu.memory_space<vmem>>, vector<1x16x128xf32>
      tpu.vector_store %arg9[%c0_44, %c0_45, %c0_46], %84 {strides = array<i32>} : memref<1x16x128xf32, #tpu.memory_space<vmem>>, vector<1x16x128xf32>,
    } else {
    }
    %c0_32 = arith.constant 0 : index
    %c0_33 = arith.constant 0 : index
    %c0_34 = arith.constant 0 : index
    %72 = vector.load %arg9[%c0_32, %c0_33, %c0_34] : memref<1x16x128xf32, #tpu.memory_space<vmem>>, vector<1x1x128xf32>
    %73 = vector.shape_cast %72 : vector<1x1x128xf32> to vector<1x128xf32>
    %74 = arith.addf %73, %65 : vector<1x128xf32>
    %c0_35 = arith.constant 0 : index
    %c0_36 = arith.constant 0 : index
    %c0_37 = arith.constant 0 : index
    %75 = vector.load %arg9[%c0_35, %c0_36, %c0_37] : memref<1x16x128xf32, #tpu.memory_space<vmem>>, vector<1x1x128xf32>
    %76 = vector.shape_cast %75 : vector<1x1x128xf32> to vector<1x128xf32>
    %77 = vector.shape_cast %74 : vector<1x128xf32> to vector<1x1x128xf32>
    tpu.vector_store %arg9[%c0_35, %c0_36, %c0_37], %77 {strides = array<i32>} : memref<1x16x128xf32, #tpu.memory_space<vmem>>, vector<1x1x128xf32>,
    %c0_38 = arith.constant 0 : index
    %c8 = arith.constant 8 : index
    %c0_39 = arith.constant 0 : index
    %78 = vector.load %arg9[%c0_38, %c8, %c0_39] : memref<1x16x128xf32, #tpu.memory_space<vmem>>, vector<1x1x128xf32>
    %79 = vector.shape_cast %78 : vector<1x1x128xf32> to vector<1x128xf32>
    %80 = arith.addf %79, %68 : vector<1x128xf32>
    %c0_40 = arith.constant 0 : index
    %c8_41 = arith.constant 8 : index
    %c0_42 = arith.constant 0 : index
    %81 = vector.load %arg9[%c0_40, %c8_41, %c0_42] : memref<1x16x128xf32, #tpu.memory_space<vmem>>, vector<1x1x128xf32>
    %82 = vector.shape_cast %81 : vector<1x1x128xf32> to vector<1x128xf32>
    %83 = vector.shape_cast %80 : vector<1x128xf32> to vector<1x1x128xf32>
    tpu.vector_store %arg9[%c0_40, %c8_41, %c0_42], %83 {strides = array<i32>} : memref<1x16x128xf32, #tpu.memory_space<vmem>>, vector<1x1x128xf32>,
    return
  }
  func.func @transform_0(%arg0: i32, %arg1: i32) -> (i32, i32, i32) {
    %c0_i32 = arith.constant 0 : i32
    %c0_i32_0 = arith.constant 0 : i32
    return %arg0, %arg1, %c0_i32 : i32, i32, i32
  }
  func.func @transform_1(%arg0: i32, %arg1: i32) -> (i32, i32, i32) {
    %c1_i32 = arith.constant 1 : i32
    %0 = arith.addi %arg1, %c1_i32 : i32
    %c1_i32_0 = arith.constant 1 : i32
    %1 = arith.muli %0, %c1_i32_0 : i32
    %c1_i32_1 = arith.constant 1 : i32
    %2 = arith.minsi %1, %c1_i32_1 : i32
    %c0_i32 = arith.constant 0 : i32
    %c0_i32_2 = arith.constant 0 : i32
    return %arg0, %2, %c0_i32 : i32, i32, i32
  }
  func.func @transform_2(%arg0: i32, %arg1: i32) -> (i32, i32) {
    %c0_i32 = arith.constant 0 : i32
    %c0_i32_0 = arith.constant 0 : i32
    %c0_i32_1 = arith.constant 0 : i32
    return %c0_i32, %c0_i32_0 : i32, i32
  }
  func.func @transform_3(%arg0: i32, %arg1: i32) -> (i32, i32) {
    %c0_i32 = arith.constant 0 : i32
    %c0_i32_0 = arith.constant 0 : i32
    %c0_i32_1 = arith.constant 0 : i32
    return %c0_i32, %c0_i32_0 : i32, i32
  }
  func.func @transform_4(%arg0: i32, %arg1: i32) -> (i32, i32) {
    %c0_i32 = arith.constant 0 : i32
    %c0_i32_0 = arith.constant 0 : i32
    %c0_i32_1 = arith.constant 0 : i32
    return %c0_i32, %c0_i32_0 : i32, i32
  }
  func.func @transform_5(%arg0: i32, %arg1: i32) -> (i32, i32) {
    %c0_i32 = arith.constant 0 : i32
    %c0_i32_0 = arith.constant 0 : i32
    %c0_i32_1 = arith.constant 0 : i32
    return %c0_i32, %c0_i32_0 : i32, i32
  }
  func.func @transform_6(%arg0: i32, %arg1: i32) -> (i32, i32, i32) {
    %c0_i32 = arith.constant 0 : i32
    %c0_i32_0 = arith.constant 0 : i32
    return %arg0, %arg1, %c0_i32 : i32, i32, i32
  }
  func.func @transform_7(%arg0: i32, %arg1: i32) -> (i32, i32, i32) {
    %c0_i32 = arith.constant 0 : i32
    %c0_i32_0 = arith.constant 0 : i32
    %c0_i32_1 = arith.constant 0 : i32
    return %arg0, %c0_i32, %c0_i32_0 : i32, i32, i32
  }
}

module attributes {stable_mosaic.version = 11 : i64} {
  func.func @_pass2_kernel(%arg0: i32, %arg1: i32, %arg2: memref<1x16x128xbf16, #tpu.memory_space<vmem>>, %arg3: memref<1x128xf32, #tpu.memory_space<vmem>>, %arg4: memref<1x128xf32, #tpu.memory_space<vmem>>, %arg5: memref<128x128xbf16, #tpu.memory_space<vmem>>, %arg6: memref<1x128xf32, #tpu.memory_space<vmem>>, %arg7: memref<1x16x128xf32, #tpu.memory_space<vmem>>) attributes {dimension_semantics = [#tpu.dimension_semantics<parallel>, #tpu.dimension_semantics<parallel>], iteration_bounds = array<i64: 2, 2>, scalar_prefetch = 0 : i64, scratch_operands = 0 : i64, tpu.core_type = #tpu.core_type<tc>, window_params = [{transform_indices = @transform_0, window_bounds = array<i64: 1, 16, 128>}, {pipeline_mode = #tpu.pipeline_mode<synchronous>, transform_indices = @transform_1, window_bounds = array<i64: 1, 128>}, {pipeline_mode = #tpu.pipeline_mode<synchronous>, transform_indices = @transform_2, window_bounds = array<i64: 1, 128>}, {pipeline_mode = #tpu.pipeline_mode<synchronous>, transform_indices = @transform_3, window_bounds = array<i64: 128, 128>}, {pipeline_mode = #tpu.pipeline_mode<synchronous>, transform_indices = @transform_4, window_bounds = array<i64: 1, 128>}, {transform_indices = @transform_5, window_bounds = array<i64: 1, 16, 128>}]} {
    %c0 = arith.constant 0 : index
    %c0_0 = arith.constant 0 : index
    %c0_1 = arith.constant 0 : index
    %0 = vector.load %arg2[%c0, %c0_0, %c0_1] : memref<1x16x128xbf16, #tpu.memory_space<vmem>>, vector<1x16x128xbf16>
    %1 = vector.shape_cast %0 : vector<1x16x128xbf16> to vector<16x128xbf16>
    %2 = arith.extf %1 : vector<16x128xbf16> to vector<16x128xf32>
    %c0_2 = arith.constant 0 : index
    %c0_3 = arith.constant 0 : index
    %3 = vector.load %arg3[%c0_2, %c0_3] : memref<1x128xf32, #tpu.memory_space<vmem>>, vector<1x128xf32>
    %4 = vector.broadcast %3 : vector<1x128xf32> to vector<16x128xf32>
    %5 = arith.mulf %2, %4 : vector<16x128xf32>
    %c0_4 = arith.constant 0 : index
    %c0_5 = arith.constant 0 : index
    %6 = vector.load %arg4[%c0_4, %c0_5] : memref<1x128xf32, #tpu.memory_space<vmem>>, vector<1x128xf32>
    %7 = vector.broadcast %6 : vector<1x128xf32> to vector<16x128xf32>
    %8 = arith.addf %5, %7 : vector<16x128xf32>
    %cst = arith.constant 0.000000e+00 : f32
    %9 = vector.broadcast %cst : f32 to vector<16x128xf32>
    %10 = arith.maximumf %8, %9 : vector<16x128xf32>
    %11 = arith.truncf %10 : vector<16x128xf32> to vector<16x128xbf16>
    %c0_6 = arith.constant 0 : index
    %c0_7 = arith.constant 0 : index
    %12 = vector.load %arg5[%c0_6, %c0_7] : memref<128x128xbf16, #tpu.memory_space<vmem>>, vector<128x128xbf16>
    %cst_8 = arith.constant dense<0.000000e+00> : vector<16x128xf32>
    %13 = tpu.matmul %11, %12, %cst_8 {dimension_numbers = #tpu.dot_dimension_numbers<[1], [0], [0], [1], [0, 0, 1, 1], [], []>} : vector<16x128xbf16>, vector<128x128xbf16>, vector<16x128xf32> -> vector<16x128xf32>
    %c0_9 = arith.constant 0 : index
    %c0_10 = arith.constant 0 : index
    %14 = vector.load %arg6[%c0_9, %c0_10] : memref<1x128xf32, #tpu.memory_space<vmem>>, vector<1x128xf32>
    %15 = vector.broadcast %14 : vector<1x128xf32> to vector<16x128xf32>
    %16 = arith.addf %13, %15 : vector<16x128xf32>
    %c0_11 = arith.constant 0 : index
    %c0_12 = arith.constant 0 : index
    %c0_13 = arith.constant 0 : index
    %17 = vector.load %arg7[%c0_11, %c0_12, %c0_13] : memref<1x16x128xf32, #tpu.memory_space<vmem>>, vector<1x16x128xf32>
    %18 = vector.shape_cast %17 : vector<1x16x128xf32> to vector<16x128xf32>
    %19 = vector.shape_cast %16 : vector<16x128xf32> to vector<1x16x128xf32>
    tpu.vector_store %arg7[%c0_11, %c0_12, %c0_13], %19 {strides = array<i32>} : memref<1x16x128xf32, #tpu.memory_space<vmem>>, vector<1x16x128xf32>,
    return
  }
  func.func @transform_0(%arg0: i32, %arg1: i32) -> (i32, i32, i32) {
    %c0_i32 = arith.constant 0 : i32
    %c0_i32_0 = arith.constant 0 : i32
    return %arg0, %arg1, %c0_i32 : i32, i32, i32
  }
  func.func @transform_1(%arg0: i32, %arg1: i32) -> (i32, i32) {
    %c0_i32 = arith.constant 0 : i32
    %c0_i32_0 = arith.constant 0 : i32
    %c0_i32_1 = arith.constant 0 : i32
    return %c0_i32, %c0_i32_0 : i32, i32
  }
  func.func @transform_2(%arg0: i32, %arg1: i32) -> (i32, i32) {
    %c0_i32 = arith.constant 0 : i32
    %c0_i32_0 = arith.constant 0 : i32
    %c0_i32_1 = arith.constant 0 : i32
    return %c0_i32, %c0_i32_0 : i32, i32
  }
  func.func @transform_3(%arg0: i32, %arg1: i32) -> (i32, i32) {
    %c0_i32 = arith.constant 0 : i32
    %c0_i32_0 = arith.constant 0 : i32
    %c0_i32_1 = arith.constant 0 : i32
    return %c0_i32, %c0_i32_0 : i32, i32
  }
  func.func @transform_4(%arg0: i32, %arg1: i32) -> (i32, i32) {
    %c0_i32 = arith.constant 0 : i32
    %c0_i32_0 = arith.constant 0 : i32
    %c0_i32_1 = arith.constant 0 : i32
    return %c0_i32, %c0_i32_0 : i32, i32
  }
  func.func @transform_5(%arg0: i32, %arg1: i32) -> (i32, i32, i32) {
    %c0_i32 = arith.constant 0 : i32
    %c0_i32_0 = arith.constant 0 : i32
    return %arg0, %arg1, %c0_i32 : i32, i32, i32
  }
}

</mosaic_0001>

<llo_original>
// kernel: conformer_convolution.3
$region0: #{conformer_convolution.3}
  #allocation0 [shape = 'u32[]', space=smem, size = 0x4, offset = 0x4, fixed_abs, tag = 'smem constant byte address 0x4 - core index']
  #allocation1 [shape = 'u32[72,128]{1,0:T(1,128)}', space=vmem, size = 0x9000, scoped, tag = 'internal scratch']
  %s0 = inlined_call_operand.vmem [shape: bf16[2,32,128], index: 0, kind: input, shape index: {}]
  %s1 = inlined_call_operand.vmem [shape: f32[1,128], index: 1, kind: input, shape index: {}]
  %s2 = inlined_call_operand.vmem [shape: f32[1,128], index: 2, kind: input, shape index: {}]
  %s3 = inlined_call_operand.vmem [shape: bf16[128,128], index: 3, kind: input, shape index: {}]
  %s4 = inlined_call_operand.vmem [shape: f32[1,128], index: 4, kind: input, shape index: {}]
  %s5 = inlined_call_operand.vmem [shape: f32[2,32,128], index: 5, kind: output, shape index: {}]
  %s6 = sld [smem:[#allocation0]]
  $region53: #{conformer_convolution.3} parent=0
    _
  %s8 = ssub.s32 1, %s6
  %s9 = scalar_select 0, %s8, %s6
  loop: start=0, step=1, limit=6
  $region2: #{conformer_convolution.3} parent=0 // loop_pre_header
    _
  $region3: #{conformer_convolution.3} parent=0 // loop_header
    %s11 = sphi 0, %s15
    %p12 = scmp.ge.s32.totalorder %s11, 6
    %s18 = sphi 0, %s30
    %s19 = sphi 0, %s26
    %s20 = sphi 0, %s18
    %s21 = sphi 0, %s19
    %s22 = sphi 0, %s20
    %s23 = sphi 0, %s21
    %s35 = sphi 0, %s37
    %s38 = sphi 0, %s35
    %s39 = sphi 0, %s38
    %s55 = sphi 0, %s39
    %s59 = sphi 0, %s59
    %s61 = sphi 0, %s59
    %s62 = sphi 0, %s61
    %s76 = sphi 0, %s62
    %s80 = sphi 0, %s80
    %s82 = sphi 0, %s80
    %s83 = sphi 0, %s82
    %s97 = sphi 0, %s83
    %s101 = sphi 0, %s101
    %s103 = sphi 0, %s101
    %s104 = sphi 0, %s103
    %s118 = sphi 0, %s104
    %s122 = sphi 0, %s122
    %s124 = sphi 0, %s122
    %s125 = sphi 0, %s124
    %s139 = sphi 0, %s125
    %s147 = sphi 0, %s149
    %s150 = sphi 0, %s147
    %s151 = sphi 0, %s150
    %s167 = sphi 0, %s151
  $region4: #{conformer_convolution.3} parent=0 // loop_header_branch
    %14 = sbr.rel (%p12) target = $region8
  $region5: #{conformer_convolution.3} parent=0 // loop_body
    %s16 = ssub.s32 %s11, 1
    %s17 = ssub.s32 %s11, 2
    %s24 = sadd.s32 1, %s19
    %p25 = scmp.ge.s32.totalorder %s24, 2
    %s26 = scalar_select %p25, 0, %s24
    %s27 = sadd.s32 1, %s18
    %s28 = scalar_select %p25, %s27, %s18
    %p29 = scmp.ge.s32.totalorder %s28, 2
    %s30 = scalar_select %p29, 0, %s28
    %s31 = ssub.s32 %s18, %s30
    %s32 = ssub.s32 %s19, %s26
    %s33 = sor.u32 %s31, %s32
    %p34 = scmp.eq.s32.totalorder %s33, 0
    %s36 = sadd.s32 %s35, 1
    %s37 = scalar_select %p34, %s35, %s36
    %p40 = pneg %p34
    %p41 = scmp.eq.s32.totalorder %s11, 3
    %p42 = por %p40, %p41
    %p43 = scmp.ne.s32.totalorder %s35, %s38
    %p44 = scmp.eq.s32.totalorder %s11, 0
    %p45 = por %p43, %p44
    %p46 = scmp.ne.s32.totalorder %s35, %s38
    %p47 = scmp.eq.s32.totalorder %s16, 3
    %p48 = por %p46, %p47
    %p49 = scmp.ne.s32.totalorder %s38, %s39
    %p50 = scmp.eq.s32.totalorder %s16, 0
    %p51 = por %p49, %p50
    %p52 = scmp.ne.s32.totalorder %s38, %s39
    %p53 = scmp.eq.s32.totalorder %s17, 3
    %p54 = por %p52, %p53
    %p56 = scmp.ne.s32.totalorder %s39, %s55
    %p57 = scmp.eq.s32.totalorder %s17, 0
    %p58 = por %p56, %p57
    %s60 = sadd.s32 %s59, 1
    %p63 = scmp.eq.s32.totalorder %s11, 3
    %p64 = scmp.ne.s32.totalorder %s59, %s61
    %p65 = scmp.eq.s32.totalorder %s11, 0
    %p66 = por %p64, %p65
    %p67 = scmp.ne.s32.totalorder %s59, %s61
    %p68 = scmp.eq.s32.totalorder %s16, 3
    %p69 = por %p67, %p68
    %p70 = scmp.ne.s32.totalorder %s61, %s62
    %p71 = scmp.eq.s32.totalorder %s16, 0
    %p72 = por %p70, %p71
    %p73 = scmp.ne.s32.totalorder %s61, %s62
    %p74 = scmp.eq.s32.totalorder %s17, 3
    %p75 = por %p73, %p74
    %p77 = scmp.ne.s32.totalorder %s62, %s76
    %p78 = scmp.eq.s32.totalorder %s17, 0
    %p79 = por %p77, %p78
    %s81 = sadd.s32 %s80, 1
    %p84 = scmp.eq.s32.totalorder %s11, 3
    %p85 = scmp.ne.s32.totalorder %s80, %s82
    %p86 = scmp.eq.s32.totalorder %s11, 0
    %p87 = por %p85, %p86
    %p88 = scmp.ne.s32.totalorder %s80, %s82
    %p89 = scmp.eq.s32.totalorder %s16, 3
    %p90 = por %p88, %p89
    %p91 = scmp.ne.s32.totalorder %s82, %s83
    %p92 = scmp.eq.s32.totalorder %s16, 0
    %p93 = por %p91, %p92
    %p94 = scmp.ne.s32.totalorder %s82, %s83
    %p95 = scmp.eq.s32.totalorder %s17, 3
    %p96 = por %p94, %p95
    %p98 = scmp.ne.s32.totalorder %s83, %s97
    %p99 = scmp.eq.s32.totalorder %s17, 0
    %p100 = por %p98, %p99
    %s102 = sadd.s32 %s101, 1
    %p105 = scmp.eq.s32.totalorder %s11, 3
    %p106 = scmp.ne.s32.totalorder %s101, %s103
    %p107 = scmp.eq.s32.totalorder %s11, 0
    %p108 = por %p106, %p107
    %p109 = scmp.ne.s32.totalorder %s101, %s103
    %p110 = scmp.eq.s32.totalorder %s16, 3
    %p111 = por %p109, %p110
    %p112 = scmp.ne.s32.totalorder %s103, %s104
    %p113 = scmp.eq.s32.totalorder %s16, 0
    %p114 = por %p112, %p113
    %p115 = scmp.ne.s32.totalorder %s103, %s104
    %p116 = scmp.eq.s32.totalorder %s17, 3
    %p117 = por %p115, %p116
    %p119 = scmp.ne.s32.totalorder %s104, %s118
    %p120 = scmp.eq.s32.totalorder %s17, 0
    %p121 = por %p119, %p120
    %s123 = sadd.s32 %s122, 1
    %p126 = scmp.eq.s32.totalorder %s11, 3
    %p127 = scmp.ne.s32.totalorder %s122, %s124
    %p128 = scmp.eq.s32.totalorder %s11, 0
    %p129 = por %p127, %p128
    %p130 = scmp.ne.s32.totalorder %s122, %s124
    %p131 = scmp.eq.s32.totalorder %s16, 3
    %p132 = por %p130, %p131
    %p133 = scmp.ne.s32.totalorder %s124, %s125
    %p134 = scmp.eq.s32.totalorder %s16, 0
    %p135 = por %p133, %p134
    %p136 = scmp.ne.s32.totalorder %s124, %s125
    %p137 = scmp.eq.s32.totalorder %s17, 3
    %p138 = por %p136, %p137
    %p140 = scmp.ne.s32.totalorder %s125, %s139
    %p141 = scmp.eq.s32.totalorder %s17, 0
    %p142 = por %p140, %p141
    %s143 = ssub.s32 %s18, %s30
    %s144 = ssub.s32 %s19, %s26
    %s145 = sor.u32 %s143, %s144
    %p146 = scmp.eq.s32.totalorder %s145, 0
    %s148 = sadd.s32 %s147, 1
    %s149 = scalar_select %p146, %s147, %s148
    %p152 = pneg %p146
    %p153 = scmp.eq.s32.totalorder %s11, 3
    %p154 = por %p152, %p153
    %p155 = scmp.ne.s32.totalorder %s147, %s150
    %p156 = scmp.eq.s32.totalorder %s11, 0
    %p157 = por %p155, %p156
    %p158 = scmp.ne.s32.totalorder %s147, %s150
    %p159 = scmp.eq.s32.totalorder %s16, 3
    %p160 = por %p158, %p159
    %p161 = scmp.ne.s32.totalorder %s150, %s151
    %p162 = scmp.eq.s32.totalorder %s16, 0
    %p163 = por %p161, %p162
    %p164 = scmp.ne.s32.totalorder %s150, %s151
    %p165 = scmp.eq.s32.totalorder %s17, 3
    %p166 = por %p164, %p165
    %p168 = scmp.ne.s32.totalorder %s151, %s167
    %p169 = scmp.eq.s32.totalorder %s17, 0
    %p170 = por %p168, %p169
    %p171 = scmp.le.s32.totalorder 1, %s11
    %p172 = scmp.lt.s32.totalorder %s11, 5
    %p173 = pnand %p171, %p172
    %p174 = pneg %p173
    // Predicated region
    $region9: #{conformer_convolution.3} parent=5 // pred_check
      _
    $region10: #{conformer_convolution.3} parent=5 // pred_check_branch
      %176 = sbr.rel (%p173) target = $region12
    $region11: #{conformer_convolution.3} parent=5 // pred_region
      %s177 = ssub.s32 %s11, 1
      // Predicated region
      $region13: #{conformer_convolution.3} parent=11 // pred_check
        %p178 = pneg %p72
      $region14: #{conformer_convolution.3} parent=11 // pred_check_branch
        %180 = sbr.rel (%p178) target = $region16
      $region15: #{conformer_convolution.3} parent=11 // pred_region
        _
      $region16: #{conformer_convolution.3} parent=11 // pred_fallthru
        _
      // Predicated region
      $region17: #{conformer_convolution.3} parent=11 // pred_check
        %p181 = pneg %p93
      $region18: #{conformer_convolution.3} parent=11 // pred_check_branch
        %183 = sbr.rel (%p181) target = $region20
      $region19: #{conformer_convolution.3} parent=11 // pred_region
        _
      $region20: #{conformer_convolution.3} parent=11 // pred_fallthru
        _
      // Predicated region
      $region21: #{conformer_convolution.3} parent=11 // pred_check
        %p184 = pneg %p114
      $region22: #{conformer_convolution.3} parent=11 // pred_check_branch
        %186 = sbr.rel (%p184) target = $region24
      $region23: #{conformer_convolution.3} parent=11 // pred_region
        _
      $region24: #{conformer_convolution.3} parent=11 // pred_fallthru
        _
      // Predicated region
      $region25: #{conformer_convolution.3} parent=11 // pred_check
        %p187 = pneg %p135
      $region26: #{conformer_convolution.3} parent=11 // pred_check_branch
        %189 = sbr.rel (%p187) target = $region28
      $region27: #{conformer_convolution.3} parent=11 // pred_region
        _
      $region28: #{conformer_convolution.3} parent=11 // pred_fallthru
        _
    $region12: #{conformer_convolution.3} parent=5 // pred_fallthru
      _
    %p190 = scmp.lt.s32.totalorder %s11, 4
    // Predicated region
    $region29: #{conformer_convolution.3} parent=5 // pred_check
      %p191 = pneg %p190
    $region30: #{conformer_convolution.3} parent=5 // pred_check_branch
      %193 = sbr.rel (%p191) target = $region32
    $region31: #{conformer_convolution.3} parent=5 // pred_region
      // Predicated region
      $region33: #{conformer_convolution.3} parent=31 // pred_check
        %p194 = pneg %p45
      $region34: #{conformer_convolution.3} parent=31 // pred_check_branch
        %196 = sbr.rel (%p194) target = $region36
      $region35: #{conformer_convolution.3} parent=31 // pred_region
        %s197 = smul.u32 2, %s19
        %p198 = scmp.lt.s32.totalorder %s18, 1
        %s199 = scalar_select %p198, %s18, 1
        %p200 = scmp.lt.s32.totalorder %s197, 3
        %s201 = scalar_select %p200, %s197, 3
        %s202 = smul.addr %s199, 4
        %s203 = sadd.s32 %s201, %s202
        %s204 = smul.addr %s203, 4
        %s205 = scalar_lea.vmem %s0, %s204
        %s206 = smul.u32 2, %s19
      $region36: #{conformer_convolution.3} parent=31 // pred_fallthru
        _
    $region32: #{conformer_convolution.3} parent=5 // pred_fallthru
      _
    %p207 = scmp.le.s32.totalorder 1, %s11
    %p208 = scmp.lt.s32.totalorder %s11, 5
    %p209 = pnand %p207, %p208
    %p210 = pneg %p209
    // Predicated region
    $region37: #{conformer_convolution.3} parent=5 // pred_check
      _
    $region38: #{conformer_convolution.3} parent=5 // pred_check_branch
      %212 = sbr.rel (%p209) target = $region40
    $region39: #{conformer_convolution.3} parent=5 // pred_region
      %s213 = ssub.s32 %s11, 1
      %s214 = smul.u32 2, %s21
      %p215 = scmp.lt.s32.totalorder %s20, 1
      %s216 = scalar_select %p215, %s20, 1
      %p217 = scmp.lt.s32.totalorder %s214, 3
      %s218 = scalar_select %p217, %s214, 3
      %s219 = smul.addr %s216, 4
      %s220 = sadd.s32 %s218, %s219
      %s221 = smul.addr %s220, 4
      %s222 = scalar_lea.vmem %s0, %s221
      %p223 = pneg %p51
      %p224 = pneg %p48
      %p225 = pneg %p72
      %p226 = pneg %p69
      %p227 = pneg %p93
      %p228 = pneg %p90
      %p229 = pneg %p114
      %p230 = pneg %p111
      %p231 = pneg %p135
      %p232 = pneg %p132
      %p233 = pneg %p163
      %p234 = pneg %p160
      %s235 = smul.u32 2, %s21
      %p236 = scmp.lt.s32.totalorder %s20, 1
      %s237 = scalar_select %p236, %s20, 1
      %p238 = scmp.lt.s32.totalorder %s235, 3
      %s239 = scalar_select %p238, %s235, 3
      %s240 = smul.addr %s237, 4
      %s241 = sadd.s32 %s239, %s240
      %s242 = smul.addr %s241, 8
      %s243 = scalar_lea.vmem %s5, %s242
      %s244 = smul.u32 2, %s21
      %p245 = scmp.lt.s32.totalorder %s20, 1
      %s246 = scalar_select %p245, %s20, 1
      %p247 = scmp.lt.s32.totalorder %s244, 3
      %s248 = scalar_select %p247, %s244, 3
      %s249 = smul.addr %s246, 4
      %s250 = sadd.s32 %s248, %s249
      %s251 = smul.addr %s250, 4
      %s252 = scalar_lea.vmem %s0, %s251
      %s253 = smul.u32 2, %s21
      %s254 = smul.u32 2, %s21
      %p255 = scmp.lt.s32.totalorder %s20, 1
      %s256 = scalar_select %p255, %s20, 1
      %p257 = scmp.lt.s32.totalorder %s254, 3
      %s258 = scalar_select %p257, %s254, 3
      %s259 = smul.addr %s256, 4
      %s260 = sadd.s32 %s258, %s259
      %s261 = smul.addr %s260, 8
      %s262 = scalar_lea.vmem %s5, %s261
      %s263 = smul.u32 2, %s21
      %v264 = vld [vmem:[%s252] sm:$0xf]
      %v265 = vld [vmem:[%s252 + $0x4] sm:$0xf]
      %v266 = vunpack.c.l.bf16 %v264
      %v267 = vunpack.c.l.bf16 %v265
      %v268 = vld [vmem:[%s1] sm:$0x1]
      %v270 = vperm.slane %v268, 0
      %v272 = vmul.f32 %v266, %v270
      %v273 = vmul.f32 %v267, %v270
      %v274 = vld [vmem:[%s2] sm:$0x1]
      %v276 = vperm.slane %v274, 0
      %v278 = vadd.f32 %v272, %v276
      %v279 = vadd.f32 %v273, %v276
      %v280 = vmax.f32 %v278, 0.0
      %v281 = vmax.f32 %v279, 0.0
      %v282 = vpack.c.bf16 %v281, %v280
      %v283 = vld [vmem:[%s3] sm:$0xf]
      %v284 = vld [vmem:[%s3 + $0x4] sm:$0xf]
      %v285 = vld [vmem:[%s3 + $0x8] sm:$0xf]
      %v286 = vld [vmem:[%s3 + $0xc] sm:$0xf]
      %v287 = vld [vmem:[%s3 + $0x10] sm:$0xf]
      %v288 = vld [vmem:[%s3 + $0x14] sm:$0xf]
      %v289 = vld [vmem:[%s3 + $0x18] sm:$0xf]
      %v290 = vld [vmem:[%s3 + $0x1c] sm:$0xf]
      %v291 = vld [vmem:[%s3 + $0x20] sm:$0xf]
      %v292 = vld [vmem:[%s3 + $0x24] sm:$0xf]
      %v293 = vld [vmem:[%s3 + $0x28] sm:$0xf]
      %v294 = vld [vmem:[%s3 + $0x2c] sm:$0xf]
      %v295 = vld [vmem:[%s3 + $0x30] sm:$0xf]
      %v296 = vld [vmem:[%s3 + $0x34] sm:$0xf]
      %v297 = vld [vmem:[%s3 + $0x38] sm:$0xf]
      %v298 = vld [vmem:[%s3 + $0x3c] sm:$0xf]
      %v299 = vld [vmem:[%s4] sm:$0x1]
      %v301 = vperm.slane %v299, 0
      %v319 = vunpack.c.l.b16 %v283
      %v320 = vunpack.c.l.b16 %v284
      %v321 = vunpack.c.l.b16 %v285
      %v322 = vunpack.c.l.b16 %v286
      %v323 = vunpack.c.l.b16 %v287
      %v324 = vunpack.c.l.b16 %v288
      %v325 = vunpack.c.l.b16 %v289
      %v326 = vunpack.c.l.b16 %v290
      %v327 = vunpack.c.l.b16 %v291
      %v328 = vunpack.c.l.b16 %v292
      %v329 = vunpack.c.l.b16 %v293
      %v330 = vunpack.c.l.b16 %v294
      %v331 = vunpack.c.l.b16 %v295
      %v332 = vunpack.c.l.b16 %v296
      %v333 = vunpack.c.l.b16 %v297
      %v334 = vunpack.c.l.b16 %v298
      %v335 = vpack.c.b16 %v320, %v319
      %v336 = vpack.c.b16 %v322, %v321
      %v337 = vpack.c.b16 %v324, %v323
      %v338 = vpack.c.b16 %v326, %v325
      %v339 = vpack.c.b16 %v328, %v327
      %v340 = vpack.c.b16 %v330, %v329
      %v341 = vpack.c.b16 %v332, %v331
      %v342 = vpack.c.b16 %v334, %v333
      %351 = vmatpush.bf16.msra.mxu0 %v342
      %352 = vmatpush.bf16.msra.mxu0 %v341
      %353 = vmatpush.bf16.msra.mxu0 %v340
      %354 = vmatpush.bf16.msra.mxu0 %v339
      %355 = vmatpush.bf16.msra.mxu0 %v338
      %356 = vmatpush.bf16.msra.mxu0 %v337
      %357 = vmatpush.bf16.msra.mxu0 %v336
      %358 = vmatpush.bf16.msra.mxu0 %v335
      %359 = vmatmul.bf16.gmra.mxu0 %v282
      %v360 = vpop.f32.mrf.mxu0
      %v361 = vadd.f32 %v301, %v360
      %v362 = vpop.f32.mrf.mxu0
      %v363 = vadd.f32 %v301, %v362
      %364 = vdwg.mxu0
      %365 = vst [vmem:[%s262] sm:$0xff] %v361
      %366 = vst [vmem:[%s262 + $0x8] sm:$0xff] %v363
      %s367 = smul.u32 2, %s21
      %p368 = scmp.lt.s32.totalorder %s20, 1
      %s369 = scalar_select %p368, %s20, 1
      %p370 = scmp.lt.s32.totalorder %s367, 3
      %s371 = scalar_select %p370, %s367, 3
      %s372 = smul.addr %s369, 4
      %s373 = sadd.s32 %s371, %s372
      %s374 = smul.addr %s373, 8
      %s375 = scalar_lea.vmem %s5, %s374
      // Predicated region
      $region41: #{conformer_convolution.3} parent=39 // pred_check
        %p376 = pneg %p160
      $region42: #{conformer_convolution.3} parent=39 // pred_check_branch
        %378 = sbr.rel (%p376) target = $region44
      $region43: #{conformer_convolution.3} parent=39 // pred_region
        %s379 = smul.u32 2, %s21
      $region44: #{conformer_convolution.3} parent=39 // pred_fallthru
        _
    $region40: #{conformer_convolution.3} parent=5 // pred_fallthru
      _
    %p380 = scmp.le.s32.totalorder 2, %s11
    // Predicated region
    $region45: #{conformer_convolution.3} parent=5 // pred_check
      %p381 = pneg %p380
    $region46: #{conformer_convolution.3} parent=5 // pred_check_branch
      %383 = sbr.rel (%p381) target = $region48
    $region47: #{conformer_convolution.3} parent=5 // pred_region
      %s384 = ssub.s32 %s11, 2
      // Predicated region
      $region49: #{conformer_convolution.3} parent=47 // pred_check
        %p385 = pneg %p166
      $region50: #{conformer_convolution.3} parent=47 // pred_check_branch
        %387 = sbr.rel (%p385) target = $region52
      $region51: #{conformer_convolution.3} parent=47 // pred_region
        %s388 = smul.u32 2, %s23
        %p389 = scmp.lt.s32.totalorder %s22, 1
        %s390 = scalar_select %p389, %s22, 1
        %p391 = scmp.lt.s32.totalorder %s388, 3
        %s392 = scalar_select %p391, %s388, 3
        %s393 = smul.addr %s390, 4
        %s394 = sadd.s32 %s392, %s393
        %s395 = smul.addr %s394, 8
        %s396 = scalar_lea.vmem %s5, %s395
      $region52: #{conformer_convolution.3} parent=47 // pred_fallthru
        _
    $region48: #{conformer_convolution.3} parent=5 // pred_fallthru
      _
  $region6: #{conformer_convolution.3} parent=0 // loop_footer
    %s15 = sadd.s32 1, %s11
  $region7: #{conformer_convolution.3} parent=0 // loop_footer_branch
    %10 = sbr.rel target = $region3
  $region8: #{conformer_convolution.3} parent=0 // loop_exit
    _

// kernel: conformer_convolution.2
$region0: #{conformer_convolution.2}
  #allocation0 [shape = 'u32[]', space=smem, size = 0x4, offset = 0x4, fixed_abs, tag = 'smem constant byte address 0x4 - core index']
  #allocation1 [shape = 'u32[72,128]{1,0:T(1,128)}', space=vmem, size = 0x9000, scoped, tag = 'internal scratch']
  #allocation2 [shape = 'f32[48,128]{1,0:T(8,128)}', space=vmem, size = 0x6000, scoped, tag = 'scratch operand']
  %s0 = inlined_call_operand.vmem [shape: bf16[2,32,128], index: 0, kind: input, shape index: {}, may-alias: {0,1}]
  %s1 = inlined_call_operand.vmem [shape: bf16[2,32,128], index: 1, kind: input, shape index: {}, may-alias: {0,1}]
  %s2 = inlined_call_operand.vmem [shape: bf16[128,256], index: 2, kind: input, shape index: {}]
  %s3 = inlined_call_operand.vmem [shape: f32[1,256], index: 3, kind: input, shape index: {}]
  %s4 = inlined_call_operand.vmem [shape: f32[3,128], index: 4, kind: input, shape index: {}]
  %s5 = inlined_call_operand.vmem [shape: f32[1,128], index: 5, kind: input, shape index: {}]
  %s6 = inlined_call_operand.vmem [shape: bf16[2,32,128], index: 6, kind: output, shape index: {0}]
  %s7 = inlined_call_operand.vmem [shape: f32[2,16,128], index: 7, kind: output, shape index: {1}]
  %8 = xla_tuple %s6, %s7
  %s9 = sld [smem:[#allocation0]]
  $region77: #{conformer_convolution.2} parent=0
    _
  %s11 = ssub.s32 1, %s9
  %s12 = scalar_select 0, %s11, %s9
  loop: start=0, step=1, limit=6
  $region2: #{conformer_convolution.2} parent=0 // loop_pre_header
    _
  $region3: #{conformer_convolution.2} parent=0 // loop_header
    %s14 = sphi 0, %s18
    %p15 = scmp.ge.s32.totalorder %s14, 6
    %s21 = sphi 0, %s33
    %s22 = sphi 0, %s29
    %s23 = sphi 0, %s21
    %s24 = sphi 0, %s22
    %s25 = sphi 0, %s23
    %s26 = sphi 0, %s24
    %s38 = sphi 0, %s40
    %s41 = sphi 0, %s38
    %s42 = sphi 0, %s41
    %s58 = sphi 0, %s42
    %s72 = sphi 0, %s74
    %s75 = sphi 0, %s72
    %s76 = sphi 0, %s75
    %s92 = sphi 0, %s76
    %s96 = sphi 0, %s96
    %s98 = sphi 0, %s96
    %s99 = sphi 0, %s98
    %s113 = sphi 0, %s99
    %s117 = sphi 0, %s117
    %s119 = sphi 0, %s117
    %s120 = sphi 0, %s119
    %s134 = sphi 0, %s120
    %s138 = sphi 0, %s138
    %s140 = sphi 0, %s138
    %s141 = sphi 0, %s140
    %s155 = sphi 0, %s141
    %s159 = sphi 0, %s159
    %s161 = sphi 0, %s159
    %s162 = sphi 0, %s161
    %s176 = sphi 0, %s162
    %s184 = sphi 0, %s186
    %s187 = sphi 0, %s184
    %s188 = sphi 0, %s187
    %s204 = sphi 0, %s188
    %s210 = sphi 0, %s212
    %s213 = sphi 0, %s210
    %s214 = sphi 0, %s213
    %s230 = sphi 0, %s214
  $region4: #{conformer_convolution.2} parent=0 // loop_header_branch
    %17 = sbr.rel (%p15) target = $region8
  $region5: #{conformer_convolution.2} parent=0 // loop_body
    %s19 = ssub.s32 %s14, 1
    %s20 = ssub.s32 %s14, 2
    %s27 = sadd.s32 1, %s22
    %p28 = scmp.ge.s32.totalorder %s27, 2
    %s29 = scalar_select %p28, 0, %s27
    %s30 = sadd.s32 1, %s21
    %s31 = scalar_select %p28, %s30, %s21
    %p32 = scmp.ge.s32.totalorder %s31, 2
    %s33 = scalar_select %p32, 0, %s31
    %s34 = ssub.s32 %s21, %s33
    %s35 = ssub.s32 %s22, %s29
    %s36 = sor.u32 %s34, %s35
    %p37 = scmp.eq.s32.totalorder %s36, 0
    %s39 = sadd.s32 %s38, 1
    %s40 = scalar_select %p37, %s38, %s39
    %p43 = pneg %p37
    %p44 = scmp.eq.s32.totalorder %s14, 3
    %p45 = por %p43, %p44
    %p46 = scmp.ne.s32.totalorder %s38, %s41
    %p47 = scmp.eq.s32.totalorder %s14, 0
    %p48 = por %p46, %p47
    %p49 = scmp.ne.s32.totalorder %s38, %s41
    %p50 = scmp.eq.s32.totalorder %s19, 3
    %p51 = por %p49, %p50
    %p52 = scmp.ne.s32.totalorder %s41, %s42
    %p53 = scmp.eq.s32.totalorder %s19, 0
    %p54 = por %p52, %p53
    %p55 = scmp.ne.s32.totalorder %s41, %s42
    %p56 = scmp.eq.s32.totalorder %s20, 3
    %p57 = por %p55, %p56
    %p59 = scmp.ne.s32.totalorder %s42, %s58
    %p60 = scmp.eq.s32.totalorder %s20, 0
    %p61 = por %p59, %p60
    %s62 = sadd.s32 %s22, 1
    %p63 = scmp.lt.s32.totalorder %s62, 1
    %s64 = scalar_select %p63, %s62, 1
    %s65 = sadd.s32 %s29, 1
    %p66 = scmp.lt.s32.totalorder %s65, 1
    %s67 = scalar_select %p66, %s65, 1
    %s68 = ssub.s32 %s21, %s33
    %s69 = ssub.s32 %s64, %s67
    %s70 = sor.u32 %s68, %s69
    %p71 = scmp.eq.s32.totalorder %s70, 0
    %s73 = sadd.s32 %s72, 1
    %s74 = scalar_select %p71, %s72, %s73
    %p77 = pneg %p71
    %p78 = scmp.eq.s32.totalorder %s14, 3
    %p79 = por %p77, %p78
    %p80 = scmp.ne.s32.totalorder %s72, %s75
    %p81 = scmp.eq.s32.totalorder %s14, 0
    %p82 = por %p80, %p81
    %p83 = scmp.ne.s32.totalorder %s72, %s75
    %p84 = scmp.eq.s32.totalorder %s19, 3
    %p85 = por %p83, %p84
    %p86 = scmp.ne.s32.totalorder %s75, %s76
    %p87 = scmp.eq.s32.totalorder %s19, 0
    %p88 = por %p86, %p87
    %p89 = scmp.ne.s32.totalorder %s75, %s76
    %p90 = scmp.eq.s32.totalorder %s20, 3
    %p91 = por %p89, %p90
    %p93 = scmp.ne.s32.totalorder %s76, %s92
    %p94 = scmp.eq.s32.totalorder %s20, 0
    %p95 = por %p93, %p94
    %s97 = sadd.s32 %s96, 1
    %p100 = scmp.eq.s32.totalorder %s14, 3
    %p101 = scmp.ne.s32.totalorder %s96, %s98
    %p102 = scmp.eq.s32.totalorder %s14, 0
    %p103 = por %p101, %p102
    %p104 = scmp.ne.s32.totalorder %s96, %s98
    %p105 = scmp.eq.s32.totalorder %s19, 3
    %p106 = por %p104, %p105
    %p107 = scmp.ne.s32.totalorder %s98, %s99
    %p108 = scmp.eq.s32.totalorder %s19, 0
    %p109 = por %p107, %p108
    %p110 = scmp.ne.s32.totalorder %s98, %s99
    %p111 = scmp.eq.s32.totalorder %s20, 3
    %p112 = por %p110, %p111
    %p114 = scmp.ne.s32.totalorder %s99, %s113
    %p115 = scmp.eq.s32.totalorder %s20, 0
    %p116 = por %p114, %p115
    %s118 = sadd.s32 %s117, 1
    %p121 = scmp.eq.s32.totalorder %s14, 3
    %p122 = scmp.ne.s32.totalorder %s117, %s119
    %p123 = scmp.eq.s32.totalorder %s14, 0
    %p124 = por %p122, %p123
    %p125 = scmp.ne.s32.totalorder %s117, %s119
    %p126 = scmp.eq.s32.totalorder %s19, 3
    %p127 = por %p125, %p126
    %p128 = scmp.ne.s32.totalorder %s119, %s120
    %p129 = scmp.eq.s32.totalorder %s19, 0
    %p130 = por %p128, %p129
    %p131 = scmp.ne.s32.totalorder %s119, %s120
    %p132 = scmp.eq.s32.totalorder %s20, 3
    %p133 = por %p131, %p132
    %p135 = scmp.ne.s32.totalorder %s120, %s134
    %p136 = scmp.eq.s32.totalorder %s20, 0
    %p137 = por %p135, %p136
    %s139 = sadd.s32 %s138, 1
    %p142 = scmp.eq.s32.totalorder %s14, 3
    %p143 = scmp.ne.s32.totalorder %s138, %s140
    %p144 = scmp.eq.s32.totalorder %s14, 0
    %p145 = por %p143, %p144
    %p146 = scmp.ne.s32.totalorder %s138, %s140
    %p147 = scmp.eq.s32.totalorder %s19, 3
    %p148 = por %p146, %p147
    %p149 = scmp.ne.s32.totalorder %s140, %s141
    %p150 = scmp.eq.s32.totalorder %s19, 0
    %p151 = por %p149, %p150
    %p152 = scmp.ne.s32.totalorder %s140, %s141
    %p153 = scmp.eq.s32.totalorder %s20, 3
    %p154 = por %p152, %p153
    %p156 = scmp.ne.s32.totalorder %s141, %s155
    %p157 = scmp.eq.s32.totalorder %s20, 0
    %p158 = por %p156, %p157
    %s160 = sadd.s32 %s159, 1
    %p163 = scmp.eq.s32.totalorder %s14, 3
    %p164 = scmp.ne.s32.totalorder %s159, %s161
    %p165 = scmp.eq.s32.totalorder %s14, 0
    %p166 = por %p164, %p165
    %p167 = scmp.ne.s32.totalorder %s159, %s161
    %p168 = scmp.eq.s32.totalorder %s19, 3
    %p169 = por %p167, %p168
    %p170 = scmp.ne.s32.totalorder %s161, %s162
    %p171 = scmp.eq.s32.totalorder %s19, 0
    %p172 = por %p170, %p171
    %p173 = scmp.ne.s32.totalorder %s161, %s162
    %p174 = scmp.eq.s32.totalorder %s20, 3
    %p175 = por %p173, %p174
    %p177 = scmp.ne.s32.totalorder %s162, %s176
    %p178 = scmp.eq.s32.totalorder %s20, 0
    %p179 = por %p177, %p178
    %s180 = ssub.s32 %s21, %s33
    %s181 = ssub.s32 %s22, %s29
    %s182 = sor.u32 %s180, %s181
    %p183 = scmp.eq.s32.totalorder %s182, 0
    %s185 = sadd.s32 %s184, 1
    %s186 = scalar_select %p183, %s184, %s185
    %p189 = pneg %p183
    %p190 = scmp.eq.s32.totalorder %s14, 3
    %p191 = por %p189, %p190
    %p192 = scmp.ne.s32.totalorder %s184, %s187
    %p193 = scmp.eq.s32.totalorder %s14, 0
    %p194 = por %p192, %p193
    %p195 = scmp.ne.s32.totalorder %s184, %s187
    %p196 = scmp.eq.s32.totalorder %s19, 3
    %p197 = por %p195, %p196
    %p198 = scmp.ne.s32.totalorder %s187, %s188
    %p199 = scmp.eq.s32.totalorder %s19, 0
    %p200 = por %p198, %p199
    %p201 = scmp.ne.s32.totalorder %s187, %s188
    %p202 = scmp.eq.s32.totalorder %s20, 3
    %p203 = por %p201, %p202
    %p205 = scmp.ne.s32.totalorder %s188, %s204
    %p206 = scmp.eq.s32.totalorder %s20, 0
    %p207 = por %p205, %p206
    %s208 = ssub.s32 %s21, %s33
    %p209 = scmp.eq.s32.totalorder %s208, 0
    %s211 = sadd.s32 %s210, 1
    %s212 = scalar_select %p209, %s210, %s211
    %p215 = pneg %p209
    %p216 = scmp.eq.s32.totalorder %s14, 3
    %p217 = por %p215, %p216
    %p218 = scmp.ne.s32.totalorder %s210, %s213
    %p219 = scmp.eq.s32.totalorder %s14, 0
    %p220 = por %p218, %p219
    %p221 = scmp.ne.s32.totalorder %s210, %s213
    %p222 = scmp.eq.s32.totalorder %s19, 3
    %p223 = por %p221, %p222
    %p224 = scmp.ne.s32.totalorder %s213, %s214
    %p225 = scmp.eq.s32.totalorder %s19, 0
    %p226 = por %p224, %p225
    %p227 = scmp.ne.s32.totalorder %s213, %s214
    %p228 = scmp.eq.s32.totalorder %s20, 3
    %p229 = por %p227, %p228
    %p231 = scmp.ne.s32.totalorder %s214, %s230
    %p232 = scmp.eq.s32.totalorder %s20, 0
    %p233 = por %p231, %p232
    %p234 = scmp.le.s32.totalorder 1, %s14
    %p235 = scmp.lt.s32.totalorder %s14, 5
    %p236 = pnand %p234, %p235
    %p237 = pneg %p236
    // Predicated region
    $region9: #{conformer_convolution.2} parent=5 // pred_check
      _
    $region10: #{conformer_convolution.2} parent=5 // pred_check_branch
      %239 = sbr.rel (%p236) target = $region12
    $region11: #{conformer_convolution.2} parent=5 // pred_region
      %s240 = ssub.s32 %s14, 1
      // Predicated region
      $region13: #{conformer_convolution.2} parent=11 // pred_check
        %p241 = pneg %p109
      $region14: #{conformer_convolution.2} parent=11 // pred_check_branch
        %243 = sbr.rel (%p241) target = $region16
      $region15: #{conformer_convolution.2} parent=11 // pred_region
        _
      $region16: #{conformer_convolution.2} parent=11 // pred_fallthru
        _
      // Predicated region
      $region17: #{conformer_convolution.2} parent=11 // pred_check
        %p244 = pneg %p130
      $region18: #{conformer_convolution.2} parent=11 // pred_check_branch
        %246 = sbr.rel (%p244) target = $region20
      $region19: #{conformer_convolution.2} parent=11 // pred_region
        _
      $region20: #{conformer_convolution.2} parent=11 // pred_fallthru
        _
      // Predicated region
      $region21: #{conformer_convolution.2} parent=11 // pred_check
        %p247 = pneg %p151
      $region22: #{conformer_convolution.2} parent=11 // pred_check_branch
        %249 = sbr.rel (%p247) target = $region24
      $region23: #{conformer_convolution.2} parent=11 // pred_region
        _
      $region24: #{conformer_convolution.2} parent=11 // pred_fallthru
        _
      // Predicated region
      $region25: #{conformer_convolution.2} parent=11 // pred_check
        %p250 = pneg %p172
      $region26: #{conformer_convolution.2} parent=11 // pred_check_branch
        %252 = sbr.rel (%p250) target = $region28
      $region27: #{conformer_convolution.2} parent=11 // pred_region
        _
      $region28: #{conformer_convolution.2} parent=11 // pred_fallthru
        _
    $region12: #{conformer_convolution.2} parent=5 // pred_fallthru
      _
    %p253 = scmp.lt.s32.totalorder %s14, 4
    // Predicated region
    $region29: #{conformer_convolution.2} parent=5 // pred_check
      %p254 = pneg %p253
    $region30: #{conformer_convolution.2} parent=5 // pred_check_branch
      %256 = sbr.rel (%p254) target = $region32
    $region31: #{conformer_convolution.2} parent=5 // pred_region
      // Predicated region
      $region33: #{conformer_convolution.2} parent=31 // pred_check
        %p257 = pneg %p48
      $region34: #{conformer_convolution.2} parent=31 // pred_check_branch
        %259 = sbr.rel (%p257) target = $region36
      $region35: #{conformer_convolution.2} parent=31 // pred_region
        %s260 = smul.u32 2, %s22
        %p261 = scmp.lt.s32.totalorder %s21, 1
        %s262 = scalar_select %p261, %s21, 1
        %p263 = scmp.lt.s32.totalorder %s260, 3
        %s264 = scalar_select %p263, %s260, 3
        %s265 = smul.addr %s262, 4
        %s266 = sadd.s32 %s264, %s265
        %s267 = smul.addr %s266, 4
        %s268 = scalar_lea.vmem %s0, %s267
        %s269 = smul.u32 2, %s22
      $region36: #{conformer_convolution.2} parent=31 // pred_fallthru
        _
      // Predicated region
      $region37: #{conformer_convolution.2} parent=31 // pred_check
        %p270 = pneg %p82
      $region38: #{conformer_convolution.2} parent=31 // pred_check_branch
        %272 = sbr.rel (%p270) target = $region40
      $region39: #{conformer_convolution.2} parent=31 // pred_region
        %s273 = sadd.s32 %s22, 1
        %p274 = scmp.lt.s32.totalorder %s273, 1
        %s275 = scalar_select %p274, %s273, 1
        %s276 = smul.u32 2, %s275
        %p277 = scmp.lt.s32.totalorder %s21, 1
        %s278 = scalar_select %p277, %s21, 1
        %p279 = scmp.lt.s32.totalorder %s276, 3
        %s280 = scalar_select %p279, %s276, 3
        %s281 = smul.addr %s278, 4
        %s282 = sadd.s32 %s280, %s281
        %s283 = smul.addr %s282, 4
        %s284 = scalar_lea.vmem %s1, %s283
        %s285 = sadd.s32 %s22, 1
        %p286 = scmp.lt.s32.totalorder %s285, 1
        %s287 = scalar_select %p286, %s285, 1
        %s288 = smul.u32 2, %s287
      $region40: #{conformer_convolution.2} parent=31 // pred_fallthru
        _
    $region32: #{conformer_convolution.2} parent=5 // pred_fallthru
      _
    %p289 = scmp.le.s32.totalorder 1, %s14
    %p290 = scmp.lt.s32.totalorder %s14, 5
    %p291 = pnand %p289, %p290
    %p292 = pneg %p291
    // Predicated region
    $region41: #{conformer_convolution.2} parent=5 // pred_check
      _
    $region42: #{conformer_convolution.2} parent=5 // pred_check_branch
      %294 = sbr.rel (%p291) target = $region44
    $region43: #{conformer_convolution.2} parent=5 // pred_region
      %s295 = ssub.s32 %s14, 1
      %s296 = smul.u32 2, %s24
      %p297 = scmp.lt.s32.totalorder %s23, 1
      %s298 = scalar_select %p297, %s23, 1
      %p299 = scmp.lt.s32.totalorder %s296, 3
      %s300 = scalar_select %p299, %s296, 3
      %s301 = smul.addr %s298, 4
      %s302 = sadd.s32 %s300, %s301
      %s303 = smul.addr %s302, 4
      %s304 = scalar_lea.vmem %s0, %s303
      %p305 = pneg %p54
      %p306 = pneg %p51
      %s307 = sadd.s32 %s24, 1
      %p308 = scmp.lt.s32.totalorder %s307, 1
      %s309 = scalar_select %p308, %s307, 1
      %s310 = smul.u32 2, %s309
      %p311 = scmp.lt.s32.totalorder %s23, 1
      %s312 = scalar_select %p311, %s23, 1
      %p313 = scmp.lt.s32.totalorder %s310, 3
      %s314 = scalar_select %p313, %s310, 3
      %s315 = smul.addr %s312, 4
      %s316 = sadd.s32 %s314, %s315
      %s317 = smul.addr %s316, 4
      %s318 = scalar_lea.vmem %s1, %s317
      %p319 = pneg %p88
      %p320 = pneg %p85
      %p321 = pneg %p109
      %p322 = pneg %p106
      %p323 = pneg %p130
      %p324 = pneg %p127
      %p325 = pneg %p151
      %p326 = pneg %p148
      %p327 = pneg %p172
      %p328 = pneg %p169
      %p329 = pneg %p200
      %p330 = pneg %p197
      %s331 = smul.u32 2, %s24
      %p332 = scmp.lt.s32.totalorder %s23, 1
      %s333 = scalar_select %p332, %s23, 1
      %p334 = scmp.lt.s32.totalorder %s331, 3
      %s335 = scalar_select %p334, %s331, 3
      %s336 = smul.addr %s333, 4
      %s337 = sadd.s32 %s335, %s336
      %s338 = smul.addr %s337, 4
      %s339 = scalar_lea.vmem %s6, %s338
      %p340 = pneg %p226
      %p341 = pneg %p223
      %p342 = scmp.lt.s32.totalorder %s23, 1
      %s343 = scalar_select %p342, %s23, 1
      %s344 = smul.addr %s343, 2
      %s345 = smul.addr %s344, 8
      %s346 = scalar_lea.vmem %s7, %s345
      %s347 = smul.u32 2, %s24
      %p348 = scmp.lt.s32.totalorder %s23, 1
      %s349 = scalar_select %p348, %s23, 1
      %p350 = scmp.lt.s32.totalorder %s347, 3
      %s351 = scalar_select %p350, %s347, 3
      %s352 = smul.addr %s349, 4
      %s353 = sadd.s32 %s351, %s352
      %s354 = smul.addr %s353, 4
      %s355 = scalar_lea.vmem %s0, %s354
      %s356 = smul.u32 2, %s24
      %s357 = sadd.s32 %s24, 1
      %p358 = scmp.lt.s32.totalorder %s357, 1
      %s359 = scalar_select %p358, %s357, 1
      %s360 = smul.u32 2, %s359
      %p361 = scmp.lt.s32.totalorder %s23, 1
      %s362 = scalar_select %p361, %s23, 1
      %p363 = scmp.lt.s32.totalorder %s360, 3
      %s364 = scalar_select %p363, %s360, 3
      %s365 = smul.addr %s362, 4
      %s366 = sadd.s32 %s364, %s365
      %s367 = smul.addr %s366, 4
      %s368 = scalar_lea.vmem %s1, %s367
      %s369 = sadd.s32 %s24, 1
      %p370 = scmp.lt.s32.totalorder %s369, 1
      %s371 = scalar_select %p370, %s369, 1
      %s372 = smul.u32 2, %s371
      %s373 = smul.u32 2, %s24
      %p374 = scmp.lt.s32.totalorder %s23, 1
      %s375 = scalar_select %p374, %s23, 1
      %p376 = scmp.lt.s32.totalorder %s373, 3
      %s377 = scalar_select %p376, %s373, 3
      %s378 = smul.addr %s375, 4
      %s379 = sadd.s32 %s377, %s378
      %s380 = smul.addr %s379, 4
      %s381 = scalar_lea.vmem %s6, %s380
      %s382 = smul.u32 2, %s24
      %p383 = scmp.lt.s32.totalorder %s23, 1
      %s384 = scalar_select %p383, %s23, 1
      %s385 = smul.addr %s384, 2
      %s386 = smul.addr %s385, 8
      %s387 = scalar_lea.vmem %s7, %s386
      %s388 = smul.u32 %s24, 16
      %p389 = scmp.eq.s32.totalorder %s24, 0
      // Predicated region
      $region45: #{conformer_convolution.2} parent=43 // pred_check
        %p390 = pneg %p389
      $region46: #{conformer_convolution.2} parent=43 // pred_check_branch
        %392 = sbr.rel (%p390) target = $region48
      $region47: #{conformer_convolution.2} parent=43 // pred_region
        %393 = vst [vmem:[#allocation2] sm:$0xff] 0.0
        %394 = vst [vmem:[#allocation2 + $0x8] sm:$0xff] 0.0
      $region48: #{conformer_convolution.2} parent=43 // pred_fallthru
        _
      %p395 = scmp.gt.s32.totalorder %s24, 0
      // Predicated region
      $region49: #{conformer_convolution.2} parent=43 // pred_check
        %p396 = pneg %p395
      $region50: #{conformer_convolution.2} parent=43 // pred_check_branch
        %398 = sbr.rel (%p396) target = $region52
      $region51: #{conformer_convolution.2} parent=43 // pred_region
        %v399 = vld [vmem:[#allocation2 + $0x1f] sm:$0x1]
        %400 = vst [vmem:[#allocation2 + $0xf] sm:$0x1] %v399
      $region52: #{conformer_convolution.2} parent=43 // pred_fallthru
        _
      %v401 = vld [vmem:[%s2] sm:$0xff]
      %v402 = vld [vmem:[%s2 + $0x8] sm:$0xff]
      %v403 = vld [vmem:[%s2 + $0x10] sm:$0xff]
      %v404 = vld [vmem:[%s2 + $0x18] sm:$0xff]
      %v405 = vld [vmem:[%s2 + $0x20] sm:$0xff]
      %v406 = vld [vmem:[%s2 + $0x28] sm:$0xff]
      %v407 = vld [vmem:[%s2 + $0x30] sm:$0xff]
      %v408 = vld [vmem:[%s2 + $0x38] sm:$0xff]
      %v409 = vld [vmem:[%s2 + $0x40] sm:$0xff]
      %v410 = vld [vmem:[%s2 + $0x48] sm:$0xff]
      %v411 = vld [vmem:[%s2 + $0x50] sm:$0xff]
      %v412 = vld [vmem:[%s2 + $0x58] sm:$0xff]
      %v413 = vld [vmem:[%s2 + $0x60] sm:$0xff]
      %v414 = vld [vmem:[%s2 + $0x68] sm:$0xff]
      %v415 = vld [vmem:[%s2 + $0x70] sm:$0xff]
      %v416 = vld [vmem:[%s2 + $0x78] sm:$0xff]
      %v417 = vld [vmem:[%s3] sm:$0x3]
      %v418 = vld [vmem:[%s355] sm:$0xf]
      %v419 = vld [vmem:[%s355 + $0x4] sm:$0xf]
      %v420 = vld [vmem:[%s368] sm:$0xf]
      %v421 = vld [vmem:[%s368 + $0x4] sm:$0xf]
      %v424 = vunpack.c.l.b16 %v418
      %v425 = vunpack.c.l.b16 %v419
      %v426 = vpack.c.b16 %v425, %v424
      %v430 = vunpack.c.l.b16 %v420
      %v431 = vunpack.c.l.b16 %v421
      %v432 = vpack.c.b16 %v431, %v430
      %v435 = vperm.slane %v417, 0
      %v436 = vperm.slane %v417, 1
      %v455 = vunpack.c.l.b16 %v401
      %v456 = vunpack.c.h.b16 %v401
      %v457 = vunpack.c.l.b16 %v402
      %v458 = vunpack.c.h.b16 %v402
      %v459 = vunpack.c.l.b16 %v403
      %v460 = vunpack.c.h.b16 %v403
      %v461 = vunpack.c.l.b16 %v404
      %v462 = vunpack.c.h.b16 %v404
      %v463 = vunpack.c.l.b16 %v405
      %v464 = vunpack.c.h.b16 %v405
      %v465 = vunpack.c.l.b16 %v406
      %v466 = vunpack.c.h.b16 %v406
      %v467 = vunpack.c.l.b16 %v407
      %v468 = vunpack.c.h.b16 %v407
      %v469 = vunpack.c.l.b16 %v408
      %v470 = vunpack.c.h.b16 %v408
      %v471 = vunpack.c.l.b16 %v409
      %v472 = vunpack.c.h.b16 %v409
      %v473 = vunpack.c.l.b16 %v410
      %v474 = vunpack.c.h.b16 %v410
      %v475 = vunpack.c.l.b16 %v411
      %v476 = vunpack.c.h.b16 %v411
      %v477 = vunpack.c.l.b16 %v412
      %v478 = vunpack.c.h.b16 %v412
      %v479 = vunpack.c.l.b16 %v413
      %v480 = vunpack.c.h.b16 %v413
      %v481 = vunpack.c.l.b16 %v414
      %v482 = vunpack.c.h.b16 %v414
      %v483 = vunpack.c.l.b16 %v415
      %v484 = vunpack.c.h.b16 %v415
      %v485 = vunpack.c.l.b16 %v416
      %v486 = vunpack.c.h.b16 %v416
      %v487 = vpack.c.b16 %v457, %v455
      %v488 = vpack.c.b16 %v458, %v456
      %v489 = vpack.c.b16 %v461, %v459
      %v490 = vpack.c.b16 %v462, %v460
      %v491 = vpack.c.b16 %v465, %v463
      %v492 = vpack.c.b16 %v466, %v464
      %v493 = vpack.c.b16 %v469, %v467
      %v494 = vpack.c.b16 %v470, %v468
      %v495 = vpack.c.b16 %v473, %v471
      %v496 = vpack.c.b16 %v474, %v472
      %v497 = vpack.c.b16 %v477, %v475
      %v498 = vpack.c.b16 %v478, %v476
      %v499 = vpack.c.b16 %v481, %v479
      %v500 = vpack.c.b16 %v482, %v480
      %v501 = vpack.c.b16 %v485, %v483
      %v502 = vpack.c.b16 %v486, %v484
      %519 = vmatpush.bf16.msra.mxu0 %v501
      %520 = vmatpush.bf16.msra.mxu0 %v499
      %521 = vmatpush.bf16.msra.mxu0 %v497
      %522 = vmatpush.bf16.msra.mxu0 %v495
      %523 = vmatpush.bf16.msra.mxu0 %v493
      %524 = vmatpush.bf16.msra.mxu0 %v491
      %525 = vmatpush.bf16.msra.mxu0 %v489
      %526 = vmatpush.bf16.msra.mxu0 %v487
      %527 = vmatmul.bf16.gmra.mxu0 %v426
      %v528 = vpop.f32.mrf.mxu0
      %v529 = vadd.f32 %v435, %v528
      %v530 = vpop.f32.mrf.mxu0
      %v531 = vadd.f32 %v435, %v530
      %532 = vmatmul.bf16.gmra.mxu0 %v432
      %v533 = vpop.f32.mrf.mxu0
      %v534 = vadd.f32 %v435, %v533
      %v535 = vpop.f32.mrf.mxu0
      %v536 = vadd.f32 %v435, %v535
      %537 = vdwg.mxu0
      %538 = vmatpush.bf16.msra.mxu0 %v502
      %539 = vmatpush.bf16.msra.mxu0 %v500
      %540 = vmatpush.bf16.msra.mxu0 %v498
      %541 = vmatpush.bf16.msra.mxu0 %v496
      %542 = vmatpush.bf16.msra.mxu0 %v494
      %543 = vmatpush.bf16.msra.mxu0 %v492
      %544 = vmatpush.bf16.msra.mxu0 %v490
      %545 = vmatpush.bf16.msra.mxu0 %v488
      %546 = vmatmul.bf16.gmra.mxu0 %v426
      %v547 = vpop.f32.mrf.mxu0
      %v548 = vadd.f32 %v436, %v547
      %v549 = vpop.f32.mrf.mxu0
      %v550 = vadd.f32 %v436, %v549
      %551 = vmatmul.bf16.gmra.mxu0 %v432
      %v552 = vpop.f32.mrf.mxu0
      %v553 = vadd.f32 %v436, %v552
      %v554 = vpop.f32.mrf.mxu0
      %v555 = vadd.f32 %v436, %v554
      %556 = vdwg.mxu0
      %v557 = vxor.u32 %v548, 2147483648
      %v558 = vxor.u32 %v550, 2147483648
      %v559 = vxor.u32 %v553, 2147483648
      %v560 = vxor.u32 %v555, 2147483648
      %v561 = vmul.f32 %v557, 1.442695
      %v562 = vpow.pop %v561
      %v563 = vmul.f32 %v558, 1.442695
      %v564 = vpow.pop %v563
      %v565 = vmul.f32 %v559, 1.442695
      %v566 = vpow.pop %v565
      %v567 = vmul.f32 %v560, 1.442695
      %v568 = vpow.pop %v567
      %v569 = vadd.f32 %v562, 1.0
      %v570 = vadd.f32 %v564, 1.0
      %v571 = vadd.f32 %v566, 1.0
      %v572 = vadd.f32 %v568, 1.0
      %v573 = vrcp.pop %v569
      %v574 = vmul.f32 %v569, %v573
      %v575 = vsub.f32 1.0, %v574
      %v576 = vmul.f32 %v573, %v575
      %v577 = vadd.f32 %v573, %v576
      %vm578 = vweird.f32 %v569
      %vm579 = vweird.f32 %v573
      %vm580 = vmor %vm578, %vm579
      %v581 = vsel %vm580, %v573, %v577
      %v582 = vand.u32 2147483647, %v569
      %vm583 = vcmp.eq.f32.partialorder %v582, 8.507059e+37
      %v584 = vand.u32 %v569, 2147483648
      %v585 = vor.u32 1.1754944e-38, %v584
      %v586 = vsel %vm583, %v585, %v581
      %v587 = vmul.f32 1.0, %v586
      %v588 = vrcp.pop %v570
      %v589 = vmul.f32 %v570, %v588
      %v590 = vsub.f32 1.0, %v589
      %v591 = vmul.f32 %v588, %v590
      %v592 = vadd.f32 %v588, %v591
      %vm593 = vweird.f32 %v570
      %vm594 = vweird.f32 %v588
      %vm595 = vmor %vm593, %vm594
      %v596 = vsel %vm595, %v588, %v592
      %v597 = vand.u32 2147483647, %v570
      %vm598 = vcmp.eq.f32.partialorder %v597, 8.507059e+37
      %v599 = vand.u32 %v570, 2147483648
      %v600 = vor.u32 1.1754944e-38, %v599
      %v601 = vsel %vm598, %v600, %v596
      %v602 = vmul.f32 1.0, %v601
      %v603 = vrcp.pop %v571
      %v604 = vmul.f32 %v571, %v603
      %v605 = vsub.f32 1.0, %v604
      %v606 = vmul.f32 %v603, %v605
      %v607 = vadd.f32 %v603, %v606
      %vm608 = vweird.f32 %v571
      %vm609 = vweird.f32 %v603
      %vm610 = vmor %vm608, %vm609
      %v611 = vsel %vm610, %v603, %v607
      %v612 = vand.u32 2147483647, %v571
      %vm613 = vcmp.eq.f32.partialorder %v612, 8.507059e+37
      %v614 = vand.u32 %v571, 2147483648
      %v615 = vor.u32 1.1754944e-38, %v614
      %v616 = vsel %vm613, %v615, %v611
      %v617 = vmul.f32 1.0, %v616
      %v618 = vrcp.pop %v572
      %v619 = vmul.f32 %v572, %v618
      %v620 = vsub.f32 1.0, %v619
      %v621 = vmul.f32 %v618, %v620
      %v622 = vadd.f32 %v618, %v621
      %vm623 = vweird.f32 %v572
      %vm624 = vweird.f32 %v618
      %vm625 = vmor %vm623, %vm624
      %v626 = vsel %vm625, %v618, %v622
      %v627 = vand.u32 2147483647, %v572
      %vm628 = vcmp.eq.f32.partialorder %v627, 8.507059e+37
      %v629 = vand.u32 %v572, 2147483648
      %v630 = vor.u32 1.1754944e-38, %v629
      %v631 = vsel %vm628, %v630, %v626
      %v632 = vmul.f32 1.0, %v631
      %v633 = vmul.f32 %v529, %v587
      %v634 = vmul.f32 %v531, %v602
      %v635 = vmul.f32 %v534, %v617
      %v636 = vmul.f32 %v536, %v632
      %v637 = vlaneseq
      %v638 = vshrl.u32 %v637, 7
      %v639 = vadd.s32 %v638, 8
      %v640 = vadd.s32 %v638, 16
      %v641 = vadd.s32 %v638, 24
      %v642 = vstv %s388
      %v643 = vadd.s32 %v642, %v638
      %v644 = vadd.s32 %v642, %v639
      %v645 = vadd.s32 %v642, %v640
      %v646 = vadd.s32 %v642, %v641
      %vm647 = vcmp.lt.s32.totalorder %v643, 28
      %vm648 = vcmp.lt.s32.totalorder %v644, 28
      %vm649 = vcmp.lt.s32.totalorder %v645, 28
      %vm650 = vcmp.lt.s32.totalorder %v646, 28
      %v651 = vsel %vm647, 1, 0
      %v652 = vsel %vm648, 1, 0
      %v653 = vsel %vm649, 1, 0
      %v654 = vsel %vm650, 1, 0
      %vm655 = vcmp.eq.s32.totalorder %v651, 1
      %vm656 = vcmp.eq.s32.totalorder %v652, 1
      %vm657 = vcmp.eq.s32.totalorder %v653, 1
      %vm658 = vcmp.eq.s32.totalorder %v654, 1
      %v659 = vsel %vm655, %v633, 0.0
      %v660 = vsel %vm656, %v634, 0.0
      %v661 = vsel %vm657, %v635, 0.0
      %v662 = vsel %vm658, %v636, 0.0
      %663 = vst [vmem:[#allocation2 + $0x10] sm:$0xff] %v659
      %664 = vst [vmem:[#allocation2 + $0x18] sm:$0xff] %v660
      %665 = vst [vmem:[#allocation2 + $0x20] sm:$0xff] %v661
      %666 = vst [vmem:[#allocation2 + $0x28] sm:$0xff] %v662
      %v667 = vld [vmem:[%s4] sm:$0x7]
      %v668 = vld [vmem:[#allocation2 + $0xf] sm:$0xff]
      %v669 = vld [vmem:[#allocation2 + $0x17] sm:$0xff]
      %v670 = vperm.slane %v667, 0
      %v671 = vmul.f32 %v668, %v670
      %v672 = vmul.f32 %v669, %v670
      %v673 = vadd.f32 %v671, 0.0
      %v674 = vadd.f32 %v672, 0.0
      %v675 = vld [vmem:[#allocation2 + $0x10] sm:$0xff]
      %v676 = vld [vmem:[#allocation2 + $0x18] sm:$0xff]
      %v677 = vperm.slane %v667, 1
      %v678 = vmul.f32 %v675, %v677
      %v679 = vmul.f32 %v676, %v677
      %v680 = vadd.f32 %v673, %v678
      %v681 = vadd.f32 %v674, %v679
      %v682 = vld [vmem:[#allocation2 + $0x11] sm:$0xff]
      %v683 = vld [vmem:[#allocation2 + $0x19] sm:$0xff]
      %v684 = vperm.slane %v667, 2
      %v685 = vmul.f32 %v682, %v684
      %v686 = vmul.f32 %v683, %v684
      %v687 = vadd.f32 %v680, %v685
      %v688 = vadd.f32 %v681, %v686
      %v689 = vld [vmem:[%s5] sm:$0x1]
      %v691 = vperm.slane %v689, 0
      %v693 = vadd.f32 %v687, %v691
      %v694 = vadd.f32 %v688, %v691
      %v695 = vpack.c.bf16 %v693, %v693
      %v696 = vpack.c.bf16 %v694, %v694
      %697 = vst [vmem:[%s381] sm:$0xf] %v695
      %698 = vst [vmem:[%s381 + $0x4] sm:$0xf] %v696
      %v699 = vsel %vm655, %v693, 0.0
      %v700 = vsel %vm656, %v694, 0.0
      %v701 = vadd.f32 %v699, %v700
      %v702 = vrot.slane %v701, 4
      %v703 = vadd.f32 %v701, %v702
      %v704 = vrot.slane %v703, 2
      %v705 = vadd.f32 %v703, %v704
      %v706 = vrot.slane %v705, 1
      %v707 = vadd.f32 %v705, %v706
      %v708 = vmul.f32 %v699, %v699
      %v709 = vmul.f32 %v700, %v700
      %v710 = vadd.f32 %v708, %v709
      %v711 = vrot.slane %v710, 4
      %v712 = vadd.f32 %v710, %v711
      %v713 = vrot.slane %v712, 2
      %v714 = vadd.f32 %v712, %v713
      %v715 = vrot.slane %v714, 1
      %v716 = vadd.f32 %v714, %v715
      // Predicated region
      $region53: #{conformer_convolution.2} parent=43 // pred_check
        %p717 = pneg %p389
      $region54: #{conformer_convolution.2} parent=43 // pred_check_branch
        %719 = sbr.rel (%p717) target = $region56
      $region55: #{conformer_convolution.2} parent=43 // pred_region
        %720 = vst [vmem:[%s387] sm:$0xff] 0.0
        %721 = vst [vmem:[%s387 + $0x8] sm:$0xff] 0.0
      $region56: #{conformer_convolution.2} parent=43 // pred_fallthru
        _
      %v722 = vld [vmem:[%s387] sm:$0x1]
      %v723 = vadd.f32 %v722, %v707
      %724 = vst [vmem:[%s387] sm:$0x1] %v723
      %v725 = vld [vmem:[%s387 + $0x8] sm:$0x1]
      %v726 = vadd.f32 %v725, %v716
      %727 = vst [vmem:[%s387 + $0x8] sm:$0x1] %v726
      %s728 = smul.u32 2, %s24
      %p729 = scmp.lt.s32.totalorder %s23, 1
      %s730 = scalar_select %p729, %s23, 1
      %p731 = scmp.lt.s32.totalorder %s728, 3
      %s732 = scalar_select %p731, %s728, 3
      %s733 = smul.addr %s730, 4
      %s734 = sadd.s32 %s732, %s733
      %s735 = smul.addr %s734, 4
      %s736 = scalar_lea.vmem %s6, %s735
      %p737 = scmp.lt.s32.totalorder %s23, 1
      %s738 = scalar_select %p737, %s23, 1
      %s739 = smul.addr %s738, 2
      %s740 = smul.addr %s739, 8
      %s741 = scalar_lea.vmem %s7, %s740
      // Predicated region
      $region57: #{conformer_convolution.2} parent=43 // pred_check
        %p742 = pneg %p197
      $region58: #{conformer_convolution.2} parent=43 // pred_check_branch
        %744 = sbr.rel (%p742) target = $region60
      $region59: #{conformer_convolution.2} parent=43 // pred_region
        %s745 = smul.u32 2, %s24
      $region60: #{conformer_convolution.2} parent=43 // pred_fallthru
        _
      // Predicated region
      $region61: #{conformer_convolution.2} parent=43 // pred_check
        %p746 = pneg %p223
      $region62: #{conformer_convolution.2} parent=43 // pred_check_branch
        %748 = sbr.rel (%p746) target = $region64
      $region63: #{conformer_convolution.2} parent=43 // pred_region
        _
      $region64: #{conformer_convolution.2} parent=43 // pred_fallthru
        _
    $region44: #{conformer_convolution.2} parent=5 // pred_fallthru
      _
    %p749 = scmp.le.s32.totalorder 2, %s14
    // Predicated region
    $region65: #{conformer_convolution.2} parent=5 // pred_check
      %p750 = pneg %p749
    $region66: #{conformer_convolution.2} parent=5 // pred_check_branch
      %752 = sbr.rel (%p750) target = $region68
    $region67: #{conformer_convolution.2} parent=5 // pred_region
      %s753 = ssub.s32 %s14, 2
      // Predicated region
      $region69: #{conformer_convolution.2} parent=67 // pred_check
        %p754 = pneg %p203
      $region70: #{conformer_convolution.2} parent=67 // pred_check_branch
        %756 = sbr.rel (%p754) target = $region72
      $region71: #{conformer_convolution.2} parent=67 // pred_region
        %s757 = smul.u32 2, %s26
        %p758 = scmp.lt.s32.totalorder %s25, 1
        %s759 = scalar_select %p758, %s25, 1
        %p760 = scmp.lt.s32.totalorder %s757, 3
        %s761 = scalar_select %p760, %s757, 3
        %s762 = smul.addr %s759, 4
        %s763 = sadd.s32 %s761, %s762
        %s764 = smul.addr %s763, 4
        %s765 = scalar_lea.vmem %s6, %s764
      $region72: #{conformer_convolution.2} parent=67 // pred_fallthru
        _
      // Predicated region
      $region73: #{conformer_convolution.2} parent=67 // pred_check
        %p766 = pneg %p229
      $region74: #{conformer_convolution.2} parent=67 // pred_check_branch
        %768 = sbr.rel (%p766) target = $region76
      $region75: #{conformer_convolution.2} parent=67 // pred_region
        %p769 = scmp.lt.s32.totalorder %s25, 1
        %s770 = scalar_select %p769, %s25, 1
        %s771 = smul.addr %s770, 2
        %s772 = smul.addr %s771, 8
        %s773 = scalar_lea.vmem %s7, %s772
      $region76: #{conformer_convolution.2} parent=67 // pred_fallthru
        _
    $region68: #{conformer_convolution.2} parent=5 // pred_fallthru
      _
  $region6: #{conformer_convolution.2} parent=0 // loop_footer
    %s18 = sadd.s32 1, %s14
  $region7: #{conformer_convolution.2} parent=0 // loop_footer_branch
    %13 = sbr.rel target = $region3
  $region8: #{conformer_convolution.2} parent=0 // loop_exit
    _

</llo_original>
